<compile_context>
chip_gen: v7x
topology: tpu7x:2x2x1
jax: 0.10.0
libtpu: 0.0.40
codegen_flags: <defaults>
</compile_context>

<pallas_src>
import functools
import math

import jax
import jax.numpy as jnp
from jax.experimental import pallas as pl
from jax.experimental.pallas import tpu as pltpu

EPS = 1e-5  # PyTorch nn.LayerNorm default


def _round_up(x, m):
    return ((x + m - 1) // m) * m


def _layernorm(x, w, b):
    mu = jnp.mean(x, axis=-1, keepdims=True)
    xc = x - mu
    var = jnp.mean(xc * xc, axis=-1, keepdims=True)
    return xc * jax.lax.rsqrt(var + EPS) * w + b


def ahl_kernel(text_ref, vis_ref, hyper_ref,
               ln_ref, w_in_ref, b_in_ref, wo_ref,
               out_ref, *, num_heads, batch_block, use_bf16_matmul):
    Bblk = batch_block
    Lt = text_ref.shape[1]
    Lv = vis_ref.shape[1]
    E = text_ref.shape[2]
    H = num_heads
    dh = E // H
    cs = w_in_ref.shape[1] // 3          # lane-aligned column stride of the packed in_proj
    n_t = Bblk * Lt
    n_v = Bblk * Lv

    # Optional bf16 operands for the MXU (weights already bf16 host-side when enabled);
    # accumulation stays f32.
    mm_in = (lambda x: x.astype(jnp.bfloat16)) if use_bf16_matmul else (lambda x: x)

    # Packed small parameters: rows 0..5 = ln1_w, ln1_b, ln2_w, ln2_b, ln3_w, ln3_b,
    # row 6 = out-proj bias.  Static row slices -> no runtime cost.
    lnp = ln_ref[...]
    ln1_w, ln1_b = lnp[0:1, :], lnp[1:2, :]
    ln2_w, ln2_b = lnp[2:3, :], lnp[3:4, :]
    ln3_w, ln3_b = lnp[4:5, :], lnp[5:6, :]
    bo = lnp[6:7, :]

    # Flatten the batch block into the sublane axis so LayerNorms and projections run
    # once over the whole slab (amortizes fixed cost, bigger matmuls).
    t = text_ref[...].reshape(n_t, E)
    v = vis_ref[...].reshape(n_v, E)
    hyp = hyper_ref[...].reshape(n_t, E)

    t_n = _layernorm(t, ln1_w, ln1_b)       # (n_t, E)
    v_n = _layernorm(v, ln2_w, ln2_b)       # (n_v, E)
    h_n = _layernorm(hyp, ln3_w, ln3_b)     # (n_t, E)

    # Single fused Q/K/V projection: row-stack [text_n; visual_n] and hit the
    # column-packed in_proj weight once.  The unused thirds (Q of visual rows,
    # K/V of text rows) are discarded; each third starts at a 128-lane boundary.
    x_all = jnp.concatenate([t_n, v_n], axis=0)                              # (n_t+n_v, E)
    proj = jnp.dot(mm_in(x_all), w_in_ref[...],
                   preferred_element_type=jnp.float32) + b_in_ref[...]       # (n_t+n_v, 3*cs)

    # Hoisted attention scale (single VPU pass; equivalent to dividing QK^T).
    q = proj[:n_t, 0:E] * (1.0 / math.sqrt(dh))                              # (n_t, E)
    k = proj[n_t:, cs:cs + E]                                                # (n_v, E)
    vv = proj[n_t:, 2 * cs:2 * cs + E]                                       # (n_v, E)

    # All (batch, head) pairs in one collapsed batch dim -> two batched dot_generals
    # instead of a per-batch Python loop + concat.
    q_bh = q.reshape(Bblk, Lt, H, dh).transpose(0, 2, 1, 3).reshape(Bblk * H, Lt, dh)
    k_bh = k.reshape(Bblk, Lv, H, dh).transpose(0, 2, 1, 3).reshape(Bblk * H, Lv, dh)
    v_bh = vv.reshape(Bblk, Lv, H, dh).transpose(0, 2, 1, 3).reshape(Bblk * H, Lv, dh)

    s = jnp.einsum('bqd,bkd->bqk', mm_in(q_bh), mm_in(k_bh),
                   preferred_element_type=jnp.float32)                       # (Bblk*H, Lt, Lv)
    m = jnp.max(s, axis=-1, keepdims=True)
    e = jnp.exp(s - m)
    p = e / jnp.sum(e, axis=-1, keepdims=True)   # exact softmax (f32 parity with PyTorch)

    ctx = jnp.einsum('bqk,bkd->bqd', mm_in(p), mm_in(v_bh),
                     preferred_element_type=jnp.float32)                     # (Bblk*H, Lt, dh)
    ctx = ctx.reshape(Bblk, H, Lt, dh).transpose(0, 2, 1, 3).reshape(n_t, E)

    # Output projection (once for the whole block) + residual with normalized hyper.
    attn = jnp.dot(mm_in(ctx), wo_ref[...],
                   preferred_element_type=jnp.float32) + bo
    out = attn + h_n                                                         # (n_t, E)
    out_ref[...] = out.reshape(Bblk, Lt, E).astype(out_ref.dtype)


def pack_ahl_params(params, *, use_bf16_matmul=False):
    """One-time host-side repacking of PyTorch-layout parameters.

    Call once and cache; keeps the per-call path free of transposes/concats.
    """
    E = params["wq"].shape[0]
    cs = _round_up(E, 128)                       # lane-aligned column stride
    wdt = jnp.bfloat16 if use_bf16_matmul else jnp.float32

    # Column-packed in_proj weight (in, 3*cs): [ Wq^T | Wk^T | Wv^T ], each third
    # starting at a 128-lane boundary (zero-padded at small E).
    w_in = jnp.zeros((E, 3 * cs), wdt)
    w_in = w_in.at[:, 0:E].set(params["wq"].T.astype(wdt))
    w_in = w_in.at[:, cs:cs + E].set(params["wk"].T.astype(wdt))
    w_in = w_in.at[:, 2 * cs:2 * cs + E].set(params["wv"].T.astype(wdt))

    b_in = jnp.zeros((1, 3 * cs), jnp.float32)
    b_in = b_in.at[:, 0:E].set(params["bq"])
    b_in = b_in.at[:, cs:cs + E].set(params["bk"])
    b_in = b_in.at[:, 2 * cs:2 * cs + E].set(params["bv"])

    # Small-parameter slab: 6 LN vectors + out-proj bias (rows 0..6), padded to 8 rows.
    ln_rows = jnp.concatenate(
        [params["ln1_w"], params["ln1_b"], params["ln2_w"], params["ln2_b"],
         params["ln3_w"], params["ln3_b"], params["bo"]], axis=0)            # (7, E)
    ln_slab = jnp.zeros((8, E), jnp.float32).at[0:7].set(ln_rows)

    wo = params["wo"].T.astype(wdt)                                          # (E, E)
    return {"ln_slab": ln_slab, "w_in": w_in, "b_in": b_in, "wo": wo}


def ahl_layer(text_embed, visual_embed, hyper_embed, packed, *, num_heads,
              num_batch_blocks=1, core_parallel=False, use_bf16_matmul=False):
    """Pallas AHL_layer forward.

    num_batch_blocks: 1 (default) for single-TensorCore v5e/v6e; 2 + core_parallel=True
    to split the batch across the two v7x TensorCores.
    """
    B, Lt, E = text_embed.shape
    Lv = visual_embed.shape[1]
    assert E % num_heads == 0, "embed_dim must be divisible by num_heads"
    assert B % num_batch_blocks == 0
    n_blocks = num_batch_blocks
    Bblk = B // n_blocks
    cs3 = packed["w_in"].shape[1]                # 3 * lane-aligned column stride

    seq_spec = lambda L: pl.BlockSpec((Bblk, L, E), lambda i: (i, 0, 0))

    # Constant-index parameter specs.  Weights at production size get single
    # buffering (their block index never changes) to halve weight VMEM on v7x.
    single_buffer_weights = E >= 256

    def const_spec(shape, is_weight=False):
        if is_weight and single_buffer_weights:
            return pl.BlockSpec(shape, lambda i: (0, 0), pipeline_mode=pl.Buffered(1))
        return pl.BlockSpec(shape, lambda i: (0, 0))

    in_specs = [
        seq_spec(Lt), seq_spec(Lv), seq_spec(Lt),
        const_spec((8, E)),                       # ln_slab (+ out-proj bias)
        const_spec((E, cs3), is_weight=True),     # packed in_proj weight
        const_spec((1, cs3)),                     # packed in_proj bias
        const_spec((E, E), is_weight=True),       # out_proj weight (transposed)
    ]

    if n_blocks == 1:
        dim_sem = ("arbitrary",)
    elif core_parallel:
        dim_sem = (pltpu.CORE_PARALLEL,)          # actually splits v7x TensorCores
    else:
        dim_sem = ("parallel",)

    compiler_params = pltpu.CompilerParams(
        dimension_semantics=dim_sem,
        vmem_limit_bytes=(64 << 20) if E >= 256 else None,
    )

    # TODO(synk): for production Lt/E add a grid axis over Lt tiles (K/V resident per
    # batch block) so the working set respects the 32/64 MiB scoped VMEM on v7x.
    return pl.pallas_call(
        functools.partial(ahl_kernel, num_heads=num_heads, batch_block=Bblk,
                          use_bf16_matmul=use_bf16_matmul),
        out_shape=jax.ShapeDtypeStruct((B, Lt, E), text_embed.dtype),
        grid=(n_blocks,),
        in_specs=in_specs,
        out_specs=pl.BlockSpec((Bblk, Lt, E), lambda i: (i, 0, 0)),
        compiler_params=compiler_params,
    )(text_embed, visual_embed, hyper_embed,
      packed["ln_slab"], packed["w_in"], packed["b_in"], packed["wo"])


def ahl_layer_ref(text_embed, visual_embed, hyper_embed, params, *, num_heads):
    """Pure-JAX reference (mirrors PyTorch nn.MultiheadAttention, eval mode)."""
    def ln(x, w, b):
        mu = jnp.mean(x, axis=-1, keepdims=True)
        var = jnp.mean((x - mu) ** 2, axis=-1, keepdims=True)
        return (x - mu) / jnp.sqrt(var + EPS) * w[0] + b[0]

    t = ln(text_embed, params["ln1_w"], params["ln1_b"])
    v = ln(visual_embed, params["ln2_w"], params["ln2_b"])
    h = ln(hyper_embed, params["ln3_w"], params["ln3_b"])

    B, Lt, E = t.shape
    Lv = v.shape[1]
    dh = E // num_heads

    q = t @ params["wq"].T + params["bq"][0]
    k = v @ params["wk"].T + params["bk"][0]
    vv = v @ params["wv"].T + params["bv"][0]

    q = q.reshape(B, Lt, num_heads, dh).transpose(0, 2, 1, 3)
    k = k.reshape(B, Lv, num_heads, dh).transpose(0, 2, 1, 3)
    vv = vv.reshape(B, Lv, num_heads, dh).transpose(0, 2, 1, 3)

    s = jnp.einsum('bhqd,bhkd->bhqk', q, k) / jnp.sqrt(jnp.float32(dh))
    p = jax.nn.softmax(s, axis=-1)
    ctx = jnp.einsum('bhqk,bhkd->bhqd', p, vv)
    ctx = ctx.transpose(0, 2, 1, 3).reshape(B, Lt, E)
    out = ctx @ params["wo"].T + params["bo"][0]
    return out + h


def make_params(key, embed_dim):
    ks = jax.random.split(key, 8)
    E = embed_dim
    scale = 1.0 / jnp.sqrt(jnp.float32(E))
    return {
        "ln1_w": 1.0 + 0.05 * jax.random.normal(ks[0], (1, E), jnp.float32),
        "ln1_b": 0.05 * jax.random.normal(ks[1], (1, E), jnp.float32),
        "ln2_w": 1.0 + 0.05 * jax.random.normal(ks[2], (1, E), jnp.float32),
        "ln2_b": 0.05 * jax.random.normal(ks[3], (1, E), jnp.float32),
        "ln3_w": jnp.ones((1, E), jnp.float32),
        "ln3_b": jnp.zeros((1, E), jnp.float32),
        # MultiheadAttention in_proj (split q/k/v) + out_proj, PyTorch (out, in) layout.
        "wq": scale * jax.random.normal(ks[4], (E, E), jnp.float32),
        "wk": scale * jax.random.normal(ks[5], (E, E), jnp.float32),
        "wv": scale * jax.random.normal(ks[6], (E, E), jnp.float32),
        "bq": jnp.zeros((1, E), jnp.float32),
        "bk": jnp.zeros((1, E), jnp.float32),
        "bv": jnp.zeros((1, E), jnp.float32),
        "wo": scale * jax.random.normal(ks[7], (E, E), jnp.float32),
        "bo": jnp.zeros((1, E), jnp.float32),
    }


if __name__ == "__main__":
    B, L_TEXT, L_VIS, EMBED, HEADS = 2, 8, 8, 32, 4

    key = jax.random.PRNGKey(0)
    k_t, k_v, k_h, k_p = jax.random.split(key, 4)
    text_embed = jax.random.normal(k_t, (B, L_TEXT, EMBED), jnp.float32)
    visual_embed = jax.random.normal(k_v, (B, L_VIS, EMBED), jnp.float32)
    hyper_embed = jax.random.normal(k_h, (B, L_TEXT, EMBED), jnp.float32)
    params = make_params(k_p, EMBED)

    # One-time host-side packing (hoisted out of the per-call path).
    packed = pack_ahl_params(params)

    ahl = jax.jit(functools.partial(ahl_layer, num_heads=HEADS))
    out = ahl(text_embed, visual_embed, hyper_embed, packed)
    out = jax.block_until_ready(out)

    ref = ahl_layer_ref(text_embed, visual_embed, hyper_embed, params, num_heads=HEADS)
    assert out.shape == (B, L_TEXT, EMBED)
    max_err = float(jnp.max(jnp.abs(out - ref)))
    # Everything is f32 with f32 accumulation and an exact softmax -> tight tolerance.
    assert jnp.allclose(out, ref, atol=1e-3, rtol=1e-3), max_err

    print("KERNEL_OK")
</pallas_src>

<mosaic_0001>
module attributes {stable_mosaic.version = 11 : i64} {
  func.func @ahl_kernel(%arg0: i32, %arg1: memref<2x8x32xf32, #tpu.memory_space<vmem>>, %arg2: memref<2x8x32xf32, #tpu.memory_space<vmem>>, %arg3: memref<2x8x32xf32, #tpu.memory_space<vmem>>, %arg4: memref<8x32xf32, #tpu.memory_space<vmem>>, %arg5: memref<32x384xf32, #tpu.memory_space<vmem>>, %arg6: memref<1x384xf32, #tpu.memory_space<vmem>>, %arg7: memref<32x32xf32, #tpu.memory_space<vmem>>, %arg8: memref<2x8x32xf32, #tpu.memory_space<vmem>>) attributes {dimension_semantics = [#tpu.dimension_semantics<arbitrary>], iteration_bounds = array<i64: 1>, scalar_prefetch = 0 : i64, scratch_operands = 0 : i64, tpu.core_type = #tpu.core_type<tc>, window_params = [{transform_indices = @transform_0, window_bounds = array<i64: 2, 8, 32>}, {transform_indices = @transform_1, window_bounds = array<i64: 2, 8, 32>}, {transform_indices = @transform_2, window_bounds = array<i64: 2, 8, 32>}, {pipeline_mode = #tpu.pipeline_mode<synchronous>, transform_indices = @transform_3, window_bounds = array<i64: 8, 32>}, {pipeline_mode = #tpu.pipeline_mode<synchronous>, transform_indices = @transform_4, window_bounds = array<i64: 32, 384>}, {pipeline_mode = #tpu.pipeline_mode<synchronous>, transform_indices = @transform_5, window_bounds = array<i64: 1, 384>}, {pipeline_mode = #tpu.pipeline_mode<synchronous>, transform_indices = @transform_6, window_bounds = array<i64: 32, 32>}, {transform_indices = @transform_7, window_bounds = array<i64: 2, 8, 32>}]} {
    %c0 = arith.constant 0 : index
    %c0_0 = arith.constant 0 : index
    %0 = vector.load %arg4[%c0, %c0_0] : memref<8x32xf32, #tpu.memory_space<vmem>>, vector<8x32xf32>
    %1 = vector.extract_strided_slice %0 {offsets = [0, 0], sizes = [1, 32], strides = [1, 1]} : vector<8x32xf32> to vector<1x32xf32>
    %2 = vector.extract_strided_slice %0 {offsets = [1, 0], sizes = [1, 32], strides = [1, 1]} : vector<8x32xf32> to vector<1x32xf32>
    %3 = vector.extract_strided_slice %0 {offsets = [2, 0], sizes = [1, 32], strides = [1, 1]} : vector<8x32xf32> to vector<1x32xf32>
    %4 = vector.extract_strided_slice %0 {offsets = [3, 0], sizes = [1, 32], strides = [1, 1]} : vector<8x32xf32> to vector<1x32xf32>
    %5 = vector.extract_strided_slice %0 {offsets = [4, 0], sizes = [1, 32], strides = [1, 1]} : vector<8x32xf32> to vector<1x32xf32>
    %6 = vector.extract_strided_slice %0 {offsets = [5, 0], sizes = [1, 32], strides = [1, 1]} : vector<8x32xf32> to vector<1x32xf32>
    %7 = vector.extract_strided_slice %0 {offsets = [6, 0], sizes = [1, 32], strides = [1, 1]} : vector<8x32xf32> to vector<1x32xf32>
    %c0_1 = arith.constant 0 : index
    %c0_2 = arith.constant 0 : index
    %c0_3 = arith.constant 0 : index
    %8 = vector.load %arg1[%c0_1, %c0_2, %c0_3] : memref<2x8x32xf32, #tpu.memory_space<vmem>>, vector<2x8x32xf32>
    %9 = vector.shape_cast %8 : vector<2x8x32xf32> to vector<16x32xf32>
    %c0_4 = arith.constant 0 : index
    %c0_5 = arith.constant 0 : index
    %c0_6 = arith.constant 0 : index
    %10 = vector.load %arg2[%c0_4, %c0_5, %c0_6] : memref<2x8x32xf32, #tpu.memory_space<vmem>>, vector<2x8x32xf32>
    %11 = vector.shape_cast %10 : vector<2x8x32xf32> to vector<16x32xf32>
    %c0_7 = arith.constant 0 : index
    %c0_8 = arith.constant 0 : index
    %c0_9 = arith.constant 0 : index
    %12 = vector.load %arg3[%c0_7, %c0_8, %c0_9] : memref<2x8x32xf32, #tpu.memory_space<vmem>>, vector<2x8x32xf32>
    %13 = vector.shape_cast %12 : vector<2x8x32xf32> to vector<16x32xf32>
    %cst = arith.constant dense<0.000000e+00> : vector<16xf32>
    %14 = vector.multi_reduction <add>, %9, %cst [1] : vector<16x32xf32> to vector<16xf32>
    %15 = vector.shape_cast %14 : vector<16xf32> to vector<16x1xf32>
    %cst_10 = arith.constant 3.200000e+01 : f32
    %16 = vector.broadcast %cst_10 : f32 to vector<16x1xf32>
    %17 = arith.divf %15, %16 : vector<16x1xf32>
    %18 = vector.broadcast %17 : vector<16x1xf32> to vector<16x32xf32>
    %19 = arith.subf %9, %18 : vector<16x32xf32>
    %20 = arith.mulf %19, %19 : vector<16x32xf32>
    %cst_11 = arith.constant dense<0.000000e+00> : vector<16xf32>
    %21 = vector.multi_reduction <add>, %20, %cst_11 [1] : vector<16x32xf32> to vector<16xf32>
    %22 = vector.shape_cast %21 : vector<16xf32> to vector<16x1xf32>
    %cst_12 = arith.constant 3.200000e+01 : f32
    %23 = vector.broadcast %cst_12 : f32 to vector<16x1xf32>
    %24 = arith.divf %22, %23 : vector<16x1xf32>
    %cst_13 = arith.constant 9.99999974E-6 : f32
    %25 = vector.broadcast %cst_13 : f32 to vector<16x1xf32>
    %26 = arith.addf %24, %25 : vector<16x1xf32>
    %27 = math.rsqrt %26 : vector<16x1xf32>
    %28 = vector.broadcast %27 : vector<16x1xf32> to vector<16x32xf32>
    %29 = arith.mulf %19, %28 : vector<16x32xf32>
    %30 = vector.broadcast %1 : vector<1x32xf32> to vector<16x32xf32>
    %31 = arith.mulf %29, %30 : vector<16x32xf32>
    %32 = vector.broadcast %2 : vector<1x32xf32> to vector<16x32xf32>
    %33 = arith.addf %31, %32 : vector<16x32xf32>
    %cst_14 = arith.constant dense<0.000000e+00> : vector<16xf32>
    %34 = vector.multi_reduction <add>, %11, %cst_14 [1] : vector<16x32xf32> to vector<16xf32>
    %35 = vector.shape_cast %34 : vector<16xf32> to vector<16x1xf32>
    %cst_15 = arith.constant 3.200000e+01 : f32
    %36 = vector.broadcast %cst_15 : f32 to vector<16x1xf32>
    %37 = arith.divf %35, %36 : vector<16x1xf32>
    %38 = vector.broadcast %37 : vector<16x1xf32> to vector<16x32xf32>
    %39 = arith.subf %11, %38 : vector<16x32xf32>
    %40 = arith.mulf %39, %39 : vector<16x32xf32>
    %cst_16 = arith.constant dense<0.000000e+00> : vector<16xf32>
    %41 = vector.multi_reduction <add>, %40, %cst_16 [1] : vector<16x32xf32> to vector<16xf32>
    %42 = vector.shape_cast %41 : vector<16xf32> to vector<16x1xf32>
    %cst_17 = arith.constant 3.200000e+01 : f32
    %43 = vector.broadcast %cst_17 : f32 to vector<16x1xf32>
    %44 = arith.divf %42, %43 : vector<16x1xf32>
    %cst_18 = arith.constant 9.99999974E-6 : f32
    %45 = vector.broadcast %cst_18 : f32 to vector<16x1xf32>
    %46 = arith.addf %44, %45 : vector<16x1xf32>
    %47 = math.rsqrt %46 : vector<16x1xf32>
    %48 = vector.broadcast %47 : vector<16x1xf32> to vector<16x32xf32>
    %49 = arith.mulf %39, %48 : vector<16x32xf32>
    %50 = vector.broadcast %3 : vector<1x32xf32> to vector<16x32xf32>
    %51 = arith.mulf %49, %50 : vector<16x32xf32>
    %52 = vector.broadcast %4 : vector<1x32xf32> to vector<16x32xf32>
    %53 = arith.addf %51, %52 : vector<16x32xf32>
    %cst_19 = arith.constant dense<0.000000e+00> : vector<16xf32>
    %54 = vector.multi_reduction <add>, %13, %cst_19 [1] : vector<16x32xf32> to vector<16xf32>
    %55 = vector.shape_cast %54 : vector<16xf32> to vector<16x1xf32>
    %cst_20 = arith.constant 3.200000e+01 : f32
    %56 = vector.broadcast %cst_20 : f32 to vector<16x1xf32>
    %57 = arith.divf %55, %56 : vector<16x1xf32>
    %58 = vector.broadcast %57 : vector<16x1xf32> to vector<16x32xf32>
    %59 = arith.subf %13, %58 : vector<16x32xf32>
    %60 = arith.mulf %59, %59 : vector<16x32xf32>
    %cst_21 = arith.constant dense<0.000000e+00> : vector<16xf32>
    %61 = vector.multi_reduction <add>, %60, %cst_21 [1] : vector<16x32xf32> to vector<16xf32>
    %62 = vector.shape_cast %61 : vector<16xf32> to vector<16x1xf32>
    %cst_22 = arith.constant 3.200000e+01 : f32
    %63 = vector.broadcast %cst_22 : f32 to vector<16x1xf32>
    %64 = arith.divf %62, %63 : vector<16x1xf32>
    %cst_23 = arith.constant 9.99999974E-6 : f32
    %65 = vector.broadcast %cst_23 : f32 to vector<16x1xf32>
    %66 = arith.addf %64, %65 : vector<16x1xf32>
    %67 = math.rsqrt %66 : vector<16x1xf32>
    %68 = vector.broadcast %67 : vector<16x1xf32> to vector<16x32xf32>
    %69 = arith.mulf %59, %68 : vector<16x32xf32>
    %70 = vector.broadcast %5 : vector<1x32xf32> to vector<16x32xf32>
    %71 = arith.mulf %69, %70 : vector<16x32xf32>
    %72 = vector.broadcast %6 : vector<1x32xf32> to vector<16x32xf32>
    %73 = arith.addf %71, %72 : vector<16x32xf32>
    %74 = tpu.concatenate %33, %53 in 0 : vector<16x32xf32>, vector<16x32xf32> -> vector<32x32xf32>
    %c0_24 = arith.constant 0 : index
    %c0_25 = arith.constant 0 : index
    %75 = vector.load %arg5[%c0_24, %c0_25] : memref<32x384xf32, #tpu.memory_space<vmem>>, vector<32x384xf32>
    %cst_26 = arith.constant dense<0.000000e+00> : vector<32x384xf32>
    %76 = tpu.matmul %74, %75, %cst_26 {dimension_numbers = #tpu.dot_dimension_numbers<[1], [0], [0], [1], [0, 0, 1, 1], [], []>} : vector<32x32xf32>, vector<32x384xf32>, vector<32x384xf32> -> vector<32x384xf32>
    %c0_27 = arith.constant 0 : index
    %c0_28 = arith.constant 0 : index
    %77 = vector.load %arg6[%c0_27, %c0_28] : memref<1x384xf32, #tpu.memory_space<vmem>>, vector<1x384xf32>
    %78 = vector.broadcast %77 : vector<1x384xf32> to vector<32x384xf32>
    %79 = arith.addf %76, %78 : vector<32x384xf32>
    %80 = vector.extract_strided_slice %79 {offsets = [0, 0], sizes = [16, 32], strides = [1, 1]} : vector<32x384xf32> to vector<16x32xf32>
    %cst_29 = arith.constant 0.353553385 : f32
    %81 = vector.broadcast %cst_29 : f32 to vector<16x32xf32>
    %82 = arith.mulf %80, %81 : vector<16x32xf32>
    %83 = vector.extract_strided_slice %79 {offsets = [16, 128], sizes = [16, 32], strides = [1, 1]} : vector<32x384xf32> to vector<16x32xf32>
    %84 = vector.extract_strided_slice %79 {offsets = [16, 256], sizes = [16, 32], strides = [1, 1]} : vector<32x384xf32> to vector<16x32xf32>
    %85 = vector.shape_cast %82 : vector<16x32xf32> to vector<2x8x4x8xf32>
    %86 = tpu.transpose %85, [0, 2, 1, 3] : vector<2x8x4x8xf32> -> vector<2x4x8x8xf32>
    %87 = vector.shape_cast %86 : vector<2x4x8x8xf32> to vector<8x8x8xf32>
    %88 = vector.shape_cast %83 : vector<16x32xf32> to vector<2x8x4x8xf32>
    %89 = tpu.transpose %88, [0, 2, 1, 3] : vector<2x8x4x8xf32> -> vector<2x4x8x8xf32>
    %90 = vector.shape_cast %89 : vector<2x4x8x8xf32> to vector<8x8x8xf32>
    %91 = vector.shape_cast %84 : vector<16x32xf32> to vector<2x8x4x8xf32>
    %92 = tpu.transpose %91, [0, 2, 1, 3] : vector<2x8x4x8xf32> -> vector<2x4x8x8xf32>
    %93 = vector.shape_cast %92 : vector<2x4x8x8xf32> to vector<8x8x8xf32>
    "tpu.trace_start"() <{level = 10 : i32, message = "bqd,bkd->bqk"}> : () -> ()
    %cst_30 = arith.constant dense<0.000000e+00> : vector<8x8x8xf32>
    %94 = tpu.matmul %87, %90, %cst_30 {dimension_numbers = #tpu.dot_dimension_numbers<[2], [2], [1], [1], [0, 0, 0, 1, 1, 1], [0], [0]>} : vector<8x8x8xf32>, vector<8x8x8xf32>, vector<8x8x8xf32> -> vector<8x8x8xf32>
    "tpu.trace_stop"() : () -> ()
    %cst_31 = arith.constant dense<0xFF800000> : vector<8x8xf32>
    %95 = vector.multi_reduction <maximumf>, %94, %cst_31 [2] : vector<8x8x8xf32> to vector<8x8xf32>
    %96 = vector.shape_cast %95 : vector<8x8xf32> to vector<8x8x1xf32>
    %97 = vector.broadcast %96 : vector<8x8x1xf32> to vector<8x8x8xf32>
    %98 = arith.subf %94, %97 : vector<8x8x8xf32>
    %99 = math.exp %98 : vector<8x8x8xf32>
    %cst_32 = arith.constant dense<0.000000e+00> : vector<8x8xf32>
    %100 = vector.multi_reduction <add>, %99, %cst_32 [2] : vector<8x8x8xf32> to vector<8x8xf32>
    %101 = vector.shape_cast %100 : vector<8x8xf32> to vector<8x8x1xf32>
    %102 = vector.broadcast %101 : vector<8x8x1xf32> to vector<8x8x8xf32>
    %103 = arith.divf %99, %102 : vector<8x8x8xf32>
    "tpu.trace_start"() <{level = 10 : i32, message = "bqk,bkd->bqd"}> : () -> ()
    %cst_33 = arith.constant dense<0.000000e+00> : vector<8x8x8xf32>
    %104 = tpu.matmul %103, %93, %cst_33 {dimension_numbers = #tpu.dot_dimension_numbers<[2], [1], [1], [2], [0, 0, 0, 1, 1, 2], [0], [0]>} : vector<8x8x8xf32>, vector<8x8x8xf32>, vector<8x8x8xf32> -> vector<8x8x8xf32>
    "tpu.trace_stop"() : () -> ()
    %105 = vector.shape_cast %104 : vector<8x8x8xf32> to vector<2x4x8x8xf32>
    %106 = tpu.transpose %105, [0, 2, 1, 3] : vector<2x4x8x8xf32> -> vector<2x8x4x8xf32>
    %107 = vector.shape_cast %106 : vector<2x8x4x8xf32> to vector<16x32xf32>
    %c0_34 = arith.constant 0 : index
    %c0_35 = arith.constant 0 : index
    %108 = vector.load %arg7[%c0_34, %c0_35] : memref<32x32xf32, #tpu.memory_space<vmem>>, vector<32x32xf32>
    %cst_36 = arith.constant dense<0.000000e+00> : vector<16x32xf32>
    %109 = tpu.matmul %107, %108, %cst_36 {dimension_numbers = #tpu.dot_dimension_numbers<[1], [0], [0], [1], [0, 0, 1, 1], [], []>} : vector<16x32xf32>, vector<32x32xf32>, vector<16x32xf32> -> vector<16x32xf32>
    %110 = vector.broadcast %7 : vector<1x32xf32> to vector<16x32xf32>
    %111 = arith.addf %109, %110 : vector<16x32xf32>
    %112 = arith.addf %111, %73 : vector<16x32xf32>
    %113 = vector.shape_cast %112 : vector<16x32xf32> to vector<2x8x32xf32>
    %c0_37 = arith.constant 0 : index
    %c0_38 = arith.constant 0 : index
    %c0_39 = arith.constant 0 : index
    %114 = vector.load %arg8[%c0_37, %c0_38, %c0_39] : memref<2x8x32xf32, #tpu.memory_space<vmem>>, vector<2x8x32xf32>
    tpu.vector_store %arg8[%c0_37, %c0_38, %c0_39], %113 {strides = array<i32>} : memref<2x8x32xf32, #tpu.memory_space<vmem>>, vector<2x8x32xf32>,
    return
  }
  func.func @transform_0(%arg0: i32) -> (i32, i32, i32) {
    %c0_i32 = arith.constant 0 : i32
    %c0_i32_0 = arith.constant 0 : i32
    %c0_i32_1 = arith.constant 0 : i32
    return %arg0, %c0_i32, %c0_i32_0 : i32, i32, i32
  }
  func.func @transform_1(%arg0: i32) -> (i32, i32, i32) {
    %c0_i32 = arith.constant 0 : i32
    %c0_i32_0 = arith.constant 0 : i32
    %c0_i32_1 = arith.constant 0 : i32
    return %arg0, %c0_i32, %c0_i32_0 : i32, i32, i32
  }
  func.func @transform_2(%arg0: i32) -> (i32, i32, i32) {
    %c0_i32 = arith.constant 0 : i32
    %c0_i32_0 = arith.constant 0 : i32
    %c0_i32_1 = arith.constant 0 : i32
    return %arg0, %c0_i32, %c0_i32_0 : i32, i32, i32
  }
  func.func @transform_3(%arg0: i32) -> (i32, i32) {
    %c0_i32 = arith.constant 0 : i32
    %c0_i32_0 = arith.constant 0 : i32
    %c0_i32_1 = arith.constant 0 : i32
    return %c0_i32, %c0_i32_0 : i32, i32
  }
  func.func @transform_4(%arg0: i32) -> (i32, i32) {
    %c0_i32 = arith.constant 0 : i32
    %c0_i32_0 = arith.constant 0 : i32
    %c0_i32_1 = arith.constant 0 : i32
    return %c0_i32, %c0_i32_0 : i32, i32
  }
  func.func @transform_5(%arg0: i32) -> (i32, i32) {
    %c0_i32 = arith.constant 0 : i32
    %c0_i32_0 = arith.constant 0 : i32
    %c0_i32_1 = arith.constant 0 : i32
    return %c0_i32, %c0_i32_0 : i32, i32
  }
  func.func @transform_6(%arg0: i32) -> (i32, i32) {
    %c0_i32 = arith.constant 0 : i32
    %c0_i32_0 = arith.constant 0 : i32
    %c0_i32_1 = arith.constant 0 : i32
    return %c0_i32, %c0_i32_0 : i32, i32
  }
  func.func @transform_7(%arg0: i32) -> (i32, i32, i32) {
    %c0_i32 = arith.constant 0 : i32
    %c0_i32_0 = arith.constant 0 : i32
    %c0_i32_1 = arith.constant 0 : i32
    return %arg0, %c0_i32, %c0_i32_0 : i32, i32, i32
  }
}

</mosaic_0001>

<llo_original>
// kernel: ahl_layer.1
$region0: #{ahl_layer.1}
  #allocation0 [shape = 'u32[]', space=smem, size = 0x4, offset = 0x4, fixed_abs, tag = 'smem constant byte address 0x4 - core index']
  #allocation1 [shape = 'u32[144,128]{1,0:T(1,128)}', space=vmem, size = 0x12000, scoped, tag = 'internal scratch']
  %s0 = inlined_call_operand.hbm [shape: f32[2,8,32], index: 0, kind: input, shape index: {}]
  %s1 = inlined_call_operand.hbm [shape: f32[2,8,32], index: 1, kind: input, shape index: {}]
  %s2 = inlined_call_operand.hbm [shape: f32[2,8,32], index: 2, kind: input, shape index: {}]
  %s3 = inlined_call_operand.vmem [shape: f32[8,32], index: 3, kind: input, shape index: {}]
  %s4 = inlined_call_operand.hbm [shape: f32[32,384], index: 4, kind: input, shape index: {}]
  %s5 = inlined_call_operand.vmem [shape: f32[1,384], index: 5, kind: input, shape index: {}]
  %s6 = inlined_call_operand.hbm [shape: f32[32,32], index: 6, kind: input, shape index: {}]
  %s7 = inlined_call_operand.hbm [shape: f32[2,8,32], index: 7, kind: output, shape index: {}]
  %s8 = sld [smem:[#allocation0]]
  $region58: #{ahl_layer.1} parent=0
    _
  %s10 = ssub.s32 1, %s8
  %s11 = scalar_select 0, %s10, %s8
  $region1: #{ahl_layer.1} parent=0
    #allocation2 [shape = 'u8[8192]{0}', space=vmem, size = 0x2000, scoped, tag = 'input window, operand 0, single buffered']
    #allocation3 [shape = 's32[1]{0}', space=sflag, size = 0x4, scoped, tag = 'scoped memory for ahl_layer.1']
    #allocation4 [shape = 's32[1]{0}', space=sflag, size = 0x4, scoped, tag = 'scoped memory for ahl_layer.1']
    #allocation5 [shape = 'u8[8192]{0}', space=vmem, size = 0x2000, scoped, tag = 'input window, operand 1, single buffered']
    #allocation6 [shape = 's32[1]{0}', space=sflag, size = 0x4, scoped, tag = 'scoped memory for ahl_layer.1']
    #allocation7 [shape = 'u8[8192]{0}', space=vmem, size = 0x2000, scoped, tag = 'input window, operand 2, single buffered']
    #allocation8 [shape = 'u8[49152]{0}', space=vmem, size = 0xc000, scoped, tag = 'input window, operand 4, single buffered']
    #allocation9 [shape = 's32[1]{0}', space=sflag, size = 0x4, scoped, tag = 'scoped memory for ahl_layer.1']
    #allocation10 [shape = 'u8[16384]{0}', space=vmem, size = 0x4000, scoped, tag = 'input window, operand 6, single buffered']
    #allocation11 [shape = 'u8[8192]{0}', space=vmem, size = 0x2000, scoped, tag = 'output window, operand 0, single buffered']
    %12 = vsyncpa [#allocation3], 0
    %13 = vsyncpa [#allocation6], 0
    %14 = vsyncpa [#allocation9], 0
    %15 = vsyncpa [#allocation4], 0
    // Predicated region
    $region2: #{ahl_layer.1} parent=1 // pred_check
      _
    $region3: #{ahl_layer.1} parent=1 // pred_check_branch
      %17 = sbr.rel (0) target = $region5
    $region4: #{ahl_layer.1} parent=1 // pred_region
      %s19 = ssub.s32 256, 256
      %20 = vsyncadd [#allocation3], %s19
      %s21 = sshll.u32 [#allocation2], 4
      %s22 = int_to_ptr.vmem [resolvable:$true] %s21
      %27 = dma.hbm_to_vmem [thread:$0]  %s0, 256, %s22, [#allocation3], 128, 128, 8
    $region5: #{ahl_layer.1} parent=1 // pred_fallthru
      _
    // Predicated region
    $region6: #{ahl_layer.1} parent=1 // pred_check
      _
    $region7: #{ahl_layer.1} parent=1 // pred_check_branch
      %29 = sbr.rel (0) target = $region9
    $region8: #{ahl_layer.1} parent=1 // pred_region
      %s31 = ssub.s32 256, 256
      %32 = vsyncadd [#allocation6], %s31
      %s33 = sshll.u32 [#allocation5], 4
      %s34 = int_to_ptr.vmem [resolvable:$true] %s33
      %39 = dma.hbm_to_vmem [thread:$0]  %s1, 256, %s34, [#allocation6], 128, 128, 8
    $region9: #{ahl_layer.1} parent=1 // pred_fallthru
      _
    // Predicated region
    $region10: #{ahl_layer.1} parent=1 // pred_check
      _
    $region11: #{ahl_layer.1} parent=1 // pred_check_branch
      %41 = sbr.rel (0) target = $region13
    $region12: #{ahl_layer.1} parent=1 // pred_region
      %s43 = ssub.s32 256, 256
      %44 = vsyncadd [#allocation6], %s43
      %s45 = sshll.u32 [#allocation7], 4
      %s46 = int_to_ptr.vmem [resolvable:$true] %s45
      %51 = dma.hbm_to_vmem [thread:$0]  %s2, 256, %s46, [#allocation6], 128, 128, 8
    $region13: #{ahl_layer.1} parent=1 // pred_fallthru
      _
    // Predicated region
    $region14: #{ahl_layer.1} parent=1 // pred_check
      _
    $region15: #{ahl_layer.1} parent=1 // pred_check_branch
      %53 = sbr.rel (0) target = $region17
    $region16: #{ahl_layer.1} parent=1 // pred_region
      _
    $region17: #{ahl_layer.1} parent=1 // pred_fallthru
      _
    // Predicated region
    $region18: #{ahl_layer.1} parent=1 // pred_check
      _
    $region19: #{ahl_layer.1} parent=1 // pred_check_branch
      %55 = sbr.rel (0) target = $region21
    $region20: #{ahl_layer.1} parent=1 // pred_region
      %s57 = ssub.s32 1536, 1536
      %58 = vsyncadd [#allocation9], %s57
      %s59 = sshll.u32 [#allocation8], 4
      %s60 = int_to_ptr.vmem [resolvable:$true] %s59
      %65 = dma.hbm_to_vmem [thread:$0]  %s4, 1536, %s60, [#allocation9], 384, 384, 24
    $region21: #{ahl_layer.1} parent=1 // pred_fallthru
      _
    // Predicated region
    $region22: #{ahl_layer.1} parent=1 // pred_check
      _
    $region23: #{ahl_layer.1} parent=1 // pred_check_branch
      %67 = sbr.rel (0) target = $region25
    $region24: #{ahl_layer.1} parent=1 // pred_region
      _
    $region25: #{ahl_layer.1} parent=1 // pred_fallthru
      _
    // Predicated region
    $region26: #{ahl_layer.1} parent=1 // pred_check
      _
    $region27: #{ahl_layer.1} parent=1 // pred_check_branch
      %69 = sbr.rel (0) target = $region29
    $region28: #{ahl_layer.1} parent=1 // pred_region
      %s71 = ssub.s32 512, 512
      %72 = vsyncadd [#allocation9], %s71
      %s73 = sshll.u32 [#allocation10], 4
      %s74 = int_to_ptr.vmem [resolvable:$true] %s73
      %79 = dma.hbm_to_vmem [thread:$0]  %s6, 512, %s74, [#allocation9], 128, 128, 8
    $region29: #{ahl_layer.1} parent=1 // pred_fallthru
      _
    // Predicated region
    $region30: #{ahl_layer.1} parent=1 // pred_check
      _
    $region31: #{ahl_layer.1} parent=1 // pred_check_branch
      %81 = sbr.rel (0) target = $region33
    $region32: #{ahl_layer.1} parent=1 // pred_region
      %82 = dma.done [#allocation3], 256
    $region33: #{ahl_layer.1} parent=1 // pred_fallthru
      _
    // Predicated region
    $region34: #{ahl_layer.1} parent=1 // pred_check
      _
    $region35: #{ahl_layer.1} parent=1 // pred_check_branch
      %84 = sbr.rel (0) target = $region37
    $region36: #{ahl_layer.1} parent=1 // pred_region
      %85 = dma.done [#allocation6], 256
    $region37: #{ahl_layer.1} parent=1 // pred_fallthru
      _
    // Predicated region
    $region38: #{ahl_layer.1} parent=1 // pred_check
      _
    $region39: #{ahl_layer.1} parent=1 // pred_check_branch
      %87 = sbr.rel (0) target = $region41
    $region40: #{ahl_layer.1} parent=1 // pred_region
      %88 = dma.done [#allocation6], 256
    $region41: #{ahl_layer.1} parent=1 // pred_fallthru
      _
    // Predicated region
    $region42: #{ahl_layer.1} parent=1 // pred_check
      _
    $region43: #{ahl_layer.1} parent=1 // pred_check_branch
      %90 = sbr.rel (0) target = $region45
    $region44: #{ahl_layer.1} parent=1 // pred_region
      %91 = dma.done [#allocation9], 1536
    $region45: #{ahl_layer.1} parent=1 // pred_fallthru
      _
    // Predicated region
    $region46: #{ahl_layer.1} parent=1 // pred_check
      _
    $region47: #{ahl_layer.1} parent=1 // pred_check_branch
      %93 = sbr.rel (0) target = $region49
    $region48: #{ahl_layer.1} parent=1 // pred_region
      %94 = dma.done [#allocation9], 512
    $region49: #{ahl_layer.1} parent=1 // pred_fallthru
      _
    %v95 = vld [vmem:[%s3] sm:$0xff]
    %v96 = vld [vmem:[#allocation2] sm:$0xff]
    %v97 = vld [vmem:[#allocation2 + $0x8] sm:$0xff]
    %v98 = vld [vmem:[#allocation5] sm:$0xff]
    %v99 = vld [vmem:[#allocation5 + $0x8] sm:$0xff]
    %v100 = vld [vmem:[#allocation7] sm:$0xff]
    %v101 = vld [vmem:[#allocation7 + $0x8] sm:$0xff]
    %vm102 = vcmask 261120
    %v103 = vsel %vm102, %v96, 0.0
    %104 = vadd.xlane.f32.xlu0 %v103
    %v105 = vpop.xlane.xlu0 %104
    %v106 = vsel %vm102, %v97, 0.0
    %107 = vadd.xlane.f32.xlu0 %v106
    %v108 = vpop.xlane.xlu0 %107
    %v109 = vrcp.pop 32.0
    %v110 = vmul.f32 %v105, %v109
    %v111 = vmul.f32 %v108, %v109
    %v112 = vsub.f32 %v96, %v110
    %v113 = vsub.f32 %v97, %v111
    %v114 = vmul.f32 %v112, %v112
    %v115 = vmul.f32 %v113, %v113
    %v116 = vsel %vm102, %v114, 0.0
    %117 = vadd.xlane.f32.xlu0 %v116
    %v118 = vpop.xlane.xlu0 %117
    %v119 = vsel %vm102, %v115, 0.0
    %120 = vadd.xlane.f32.xlu0 %v119
    %v121 = vpop.xlane.xlu0 %120
    %v122 = vmul.f32 %v118, %v109
    %v123 = vmul.f32 %v121, %v109
    %v124 = vadd.f32 %v122, 1e-05
    %v125 = vadd.f32 %v123, 1e-05
    %v126 = vrsqrt.pop %v124
    %v127 = vrsqrt.pop %v125
    %v128 = vmul.f32 %v112, %v126
    %v129 = vmul.f32 %v113, %v127
    %v130 = vlaneseq
    %v131 = vshrl.u32 %v130, 7
    %v132 = vsub.s32 0, %v131
    %v133 = vrot.slane %v95, %v132
    %v134 = vmul.f32 %v128, %v133
    %v135 = vmul.f32 %v129, %v133
    %v136 = vlaneseq
    %v137 = vshrl.u32 %v136, 7
    %v138 = vsub.s32 1, %v137
    %v139 = vrot.slane %v95, %v138
    %v140 = vadd.f32 %v134, %v139
    %v141 = vadd.f32 %v135, %v139
    %v142 = vsel %vm102, %v98, 0.0
    %143 = vadd.xlane.f32.xlu0 %v142
    %v144 = vpop.xlane.xlu0 %143
    %v145 = vsel %vm102, %v99, 0.0
    %146 = vadd.xlane.f32.xlu0 %v145
    %v147 = vpop.xlane.xlu0 %146
    %v148 = vmul.f32 %v144, %v109
    %v149 = vmul.f32 %v147, %v109
    %v150 = vsub.f32 %v98, %v148
    %v151 = vsub.f32 %v99, %v149
    %v152 = vmul.f32 %v150, %v150
    %v153 = vmul.f32 %v151, %v151
    %v154 = vsel %vm102, %v152, 0.0
    %155 = vadd.xlane.f32.xlu0 %v154
    %v156 = vpop.xlane.xlu0 %155
    %v157 = vsel %vm102, %v153, 0.0
    %158 = vadd.xlane.f32.xlu0 %v157
    %v159 = vpop.xlane.xlu0 %158
    %v160 = vmul.f32 %v156, %v109
    %v161 = vmul.f32 %v159, %v109
    %v162 = vadd.f32 %v160, 1e-05
    %v163 = vadd.f32 %v161, 1e-05
    %v164 = vrsqrt.pop %v162
    %v165 = vrsqrt.pop %v163
    %v166 = vmul.f32 %v150, %v164
    %v167 = vmul.f32 %v151, %v165
    %v168 = vlaneseq
    %v169 = vshrl.u32 %v168, 7
    %v170 = vsub.s32 2, %v169
    %v171 = vrot.slane %v95, %v170
    %v172 = vmul.f32 %v166, %v171
    %v173 = vmul.f32 %v167, %v171
    %v174 = vlaneseq
    %v175 = vshrl.u32 %v174, 7
    %v176 = vsub.s32 3, %v175
    %v177 = vrot.slane %v95, %v176
    %v178 = vadd.f32 %v172, %v177
    %v179 = vadd.f32 %v173, %v177
    %v180 = vsel %vm102, %v100, 0.0
    %181 = vadd.xlane.f32.xlu0 %v180
    %v182 = vpop.xlane.xlu0 %181
    %v183 = vsel %vm102, %v101, 0.0
    %184 = vadd.xlane.f32.xlu0 %v183
    %v185 = vpop.xlane.xlu0 %184
    %v186 = vmul.f32 %v182, %v109
    %v187 = vmul.f32 %v185, %v109
    %v188 = vsub.f32 %v100, %v186
    %v189 = vsub.f32 %v101, %v187
    %v190 = vmul.f32 %v188, %v188
    %v191 = vmul.f32 %v189, %v189
    %v192 = vsel %vm102, %v190, 0.0
    %193 = vadd.xlane.f32.xlu0 %v192
    %v194 = vpop.xlane.xlu0 %193
    %v195 = vsel %vm102, %v191, 0.0
    %196 = vadd.xlane.f32.xlu0 %v195
    %v197 = vpop.xlane.xlu0 %196
    %v198 = vmul.f32 %v194, %v109
    %v199 = vmul.f32 %v197, %v109
    %v200 = vadd.f32 %v198, 1e-05
    %v201 = vadd.f32 %v199, 1e-05
    %v202 = vrsqrt.pop %v200
    %v203 = vrsqrt.pop %v201
    %v204 = vmul.f32 %v188, %v202
    %v205 = vmul.f32 %v189, %v203
    %v206 = vlaneseq
    %v207 = vshrl.u32 %v206, 7
    %v208 = vsub.s32 4, %v207
    %v209 = vrot.slane %v95, %v208
    %v210 = vmul.f32 %v204, %v209
    %v211 = vmul.f32 %v205, %v209
    %v212 = vlaneseq
    %v213 = vshrl.u32 %v212, 7
    %v214 = vsub.s32 5, %v213
    %v215 = vrot.slane %v95, %v214
    %v216 = vadd.f32 %v210, %v215
    %v217 = vadd.f32 %v211, %v215
    %v218 = vld [vmem:[#allocation8] sm:$0xff]
    %v219 = vld [vmem:[#allocation8 + $0x8] sm:$0xff]
    %v220 = vld [vmem:[#allocation8 + $0x10] sm:$0xff]
    %v221 = vld [vmem:[#allocation8 + $0x18] sm:$0xff]
    %v222 = vld [vmem:[#allocation8 + $0x20] sm:$0xff]
    %v223 = vld [vmem:[#allocation8 + $0x28] sm:$0xff]
    %v224 = vld [vmem:[#allocation8 + $0x30] sm:$0xff]
    %v225 = vld [vmem:[#allocation8 + $0x38] sm:$0xff]
    %v226 = vld [vmem:[#allocation8 + $0x40] sm:$0xff]
    %v227 = vld [vmem:[#allocation8 + $0x48] sm:$0xff]
    %v228 = vld [vmem:[#allocation8 + $0x50] sm:$0xff]
    %v229 = vld [vmem:[#allocation8 + $0x58] sm:$0xff]
    %v230 = vld [vmem:[%s5] sm:$0x7]
    %v232 = vlaneseq
    %v233 = vshrl.u32 %v232, 7
    %v234 = vsub.s32 0, %v233
    %v235 = vrot.slane %v230, %v234
    %v236 = vlaneseq
    %v237 = vshrl.u32 %v236, 7
    %v238 = vsub.s32 1, %v237
    %v239 = vrot.slane %v230, %v238
    %v240 = vlaneseq
    %v241 = vshrl.u32 %v240, 7
    %v242 = vsub.s32 2, %v241
    %v243 = vrot.slane %v230, %v242
    %v248 = vsel %vm102, %v140, 0
    %v251 = vsel %vm102, %v141, 0
    %v254 = vsel %vm102, %v178, 0
    %v257 = vsel %vm102, %v179, 0
    %259 = vmatprep.subr.mxu0 %v219
    %260 = vmatpush1.msra.mxu0 %v218
    %261 = vmatprep.subr.mxu0 %v222
    %262 = vmatpush1.msra.mxu0 %v221
    %263 = vmatprep.subr.mxu0 %v225
    %264 = vmatpush1.msra.mxu0 %v224
    %265 = vmatprep.subr.mxu0 %v228
    %266 = vmatpush1.msra.mxu0 %v227
    %267 = vmatprep.subr.mxu0 0.0
    %268 = vmatpush1.msra.mxu0 0.0
    %269 = vmatprep.subr.mxu0 0.0
    %270 = vmatpush1.msra.mxu0 0.0
    %271 = vmatprep.subr.mxu0 0.0
    %272 = vmatpush1.msra.mxu0 0.0
    %273 = vmatprep.subr.mxu0 0.0
    %274 = vmatpush1.msra.mxu0 0.0
    %275 = vmatprep.subr.mxu0 0.0
    %276 = vmatpush1.msra.mxu0 0.0
    %277 = vmatprep.subr.mxu0 0.0
    %278 = vmatpush1.msra.mxu0 0.0
    %279 = vmatprep.subr.mxu0 0.0
    %280 = vmatpush1.msra.mxu0 0.0
    %281 = vmatprep.subr.mxu0 0.0
    %282 = vmatpush1.msra.mxu0 0.0
    %283 = vmatprep.subr.mxu0 0.0
    %284 = vmatpush1.msra.mxu0 0.0
    %285 = vmatprep.subr.mxu0 0.0
    %286 = vmatpush1.msra.mxu0 0.0
    %287 = vmatprep.subr.mxu0 0.0
    %288 = vmatpush1.msra.mxu0 0.0
    %289 = vmatprep.subr.mxu0 0.0
    %290 = vmatpush1.msra.mxu0 0.0
    %291 = vmatprep.subr.mxu0 0.0
    %292 = vmatpush1.msra.mxu0 0.0
    %293 = vmatprep.subr.mxu0 0.0
    %294 = vmatpush1.msra.mxu0 0.0
    %295 = vmatprep.subr.mxu0 0.0
    %296 = vmatpush1.msra.mxu0 0.0
    %297 = vmatprep.subr.mxu0 0.0
    %298 = vmatpush1.msra.mxu0 0.0
    %299 = vmatprep.subr.mxu0 0.0
    %300 = vmatpush1.msra.mxu0 0.0
    %301 = vmatprep.subr.mxu0 0.0
    %302 = vmatpush1.msra.mxu0 0.0
    %303 = vmatprep.subr.mxu0 0.0
    %304 = vmatpush1.msra.mxu0 0.0
    %305 = vmatprep.subr.mxu0 0.0
    %306 = vmatpush1.msra.mxu0 0.0
    %307 = vmatprep.subr.mxu0 0.0
    %308 = vmatpush1.msra.mxu0 0.0
    %309 = vmatprep.subr.mxu0 0.0
    %310 = vmatpush1.msra.mxu0 0.0
    %311 = vmatprep.subr.mxu0 0.0
    %312 = vmatpush1.msra.mxu0 0.0
    %313 = vmatprep.subr.mxu0 0.0
    %314 = vmatpush1.msra.mxu0 0.0
    %315 = vmatprep.subr.mxu0 0.0
    %316 = vmatpush1.msra.mxu0 0.0
    %317 = vmatprep.subr.mxu0 0.0
    %318 = vmatpush1.msra.mxu0 0.0
    %319 = vmatprep.subr.mxu0 0.0
    %320 = vmatpush1.msra.mxu0 0.0
    %321 = vmatprep.subr.mxu0 0.0
    %322 = vmatpush1.msra.mxu0 0.0
    %323 = vmatprep.mubr.f32.mxu0 0.0
    %324 = vmatmul.mubr.f32.gmra.mrb[0].mxu0 %v248
    %v325 = vpop.f32.mrb[0].mxu0
    %v326 = vadd.f32 %v235, %v325
    %v327 = vpop.f32.mrb[0].mxu0
    %328 = vmatprep.mubr.f32.mxu0 0.0
    %329 = vmatmul.mubr.f32.gmra.mrb[0].mxu0 %v251
    %v330 = vpop.f32.mrb[0].mxu0
    %v331 = vadd.f32 %v235, %v330
    %v332 = vpop.f32.mrb[0].mxu0
    %333 = vmatprep.mubr.f32.mxu0 0.0
    %334 = vmatmul.mubr.f32.gmra.mrb[0].mxu0 %v254
    %v335 = vpop.f32.mrb[0].mxu0
    %v336 = vpop.f32.mrb[0].mxu0
    %v337 = vadd.f32 %v239, %v336
    %338 = vmatprep.mubr.f32.mxu0 0.0
    %339 = vmatmul.mubr.f32.gmra.mrb[0].mxu0 %v257
    %v340 = vpop.f32.mrb[0].mxu0
    %v341 = vpop.f32.mrb[0].mxu0
    %v342 = vadd.f32 %v239, %v341
    %343 = vdwg.mxu0
    %344 = vmatprep.subr.mxu0 0.0
    %345 = vmatpush1.msra.mxu0 %v220
    %346 = vmatprep.subr.mxu0 0.0
    %347 = vmatpush1.msra.mxu0 %v223
    %348 = vmatprep.subr.mxu0 0.0
    %349 = vmatpush1.msra.mxu0 %v226
    %350 = vmatprep.subr.mxu0 0.0
    %351 = vmatpush1.msra.mxu0 %v229
    %352 = vmatprep.subr.mxu0 0.0
    %353 = vmatpush1.msra.mxu0 0.0
    %354 = vmatprep.subr.mxu0 0.0
    %355 = vmatpush1.msra.mxu0 0.0
    %356 = vmatprep.subr.mxu0 0.0
    %357 = vmatpush1.msra.mxu0 0.0
    %358 = vmatprep.subr.mxu0 0.0
    %359 = vmatpush1.msra.mxu0 0.0
    %360 = vmatprep.subr.mxu0 0.0
    %361 = vmatpush1.msra.mxu0 0.0
    %362 = vmatprep.subr.mxu0 0.0
    %363 = vmatpush1.msra.mxu0 0.0
    %364 = vmatprep.subr.mxu0 0.0
    %365 = vmatpush1.msra.mxu0 0.0
    %366 = vmatprep.subr.mxu0 0.0
    %367 = vmatpush1.msra.mxu0 0.0
    %368 = vmatprep.subr.mxu0 0.0
    %369 = vmatpush1.msra.mxu0 0.0
    %370 = vmatprep.subr.mxu0 0.0
    %371 = vmatpush1.msra.mxu0 0.0
    %372 = vmatprep.subr.mxu0 0.0
    %373 = vmatpush1.msra.mxu0 0.0
    %374 = vmatprep.subr.mxu0 0.0
    %375 = vmatpush1.msra.mxu0 0.0
    %376 = vmatprep.subr.mxu0 0.0
    %377 = vmatpush1.msra.mxu0 0.0
    %378 = vmatprep.subr.mxu0 0.0
    %379 = vmatpush1.msra.mxu0 0.0
    %380 = vmatprep.subr.mxu0 0.0
    %381 = vmatpush1.msra.mxu0 0.0
    %382 = vmatprep.subr.mxu0 0.0
    %383 = vmatpush1.msra.mxu0 0.0
    %384 = vmatprep.subr.mxu0 0.0
    %385 = vmatpush1.msra.mxu0 0.0
    %386 = vmatprep.subr.mxu0 0.0
    %387 = vmatpush1.msra.mxu0 0.0
    %388 = vmatprep.subr.mxu0 0.0
    %389 = vmatpush1.msra.mxu0 0.0
    %390 = vmatprep.subr.mxu0 0.0
    %391 = vmatpush1.msra.mxu0 0.0
    %392 = vmatprep.subr.mxu0 0.0
    %393 = vmatpush1.msra.mxu0 0.0
    %394 = vmatprep.subr.mxu0 0.0
    %395 = vmatpush1.msra.mxu0 0.0
    %396 = vmatprep.subr.mxu0 0.0
    %397 = vmatpush1.msra.mxu0 0.0
    %398 = vmatprep.subr.mxu0 0.0
    %399 = vmatpush1.msra.mxu0 0.0
    %400 = vmatprep.subr.mxu0 0.0
    %401 = vmatpush1.msra.mxu0 0.0
    %402 = vmatprep.subr.mxu0 0.0
    %403 = vmatpush1.msra.mxu0 0.0
    %404 = vmatprep.subr.mxu0 0.0
    %405 = vmatpush1.msra.mxu0 0.0
    %406 = vmatprep.subr.mxu0 0.0
    %407 = vmatpush1.msra.mxu0 0.0
    %408 = vmatprep.mubr.f32.mxu0 0.0
    %409 = vmatmul.mubr.f32.gmra.mrb[0].mxu0 %v248
    %v410 = vpop.f32.mrb[0].mxu0
    %v411 = vpop.f32.mrb[0].mxu0
    %412 = vmatprep.mubr.f32.mxu0 0.0
    %413 = vmatmul.mubr.f32.gmra.mrb[0].mxu0 %v251
    %v414 = vpop.f32.mrb[0].mxu0
    %v415 = vpop.f32.mrb[0].mxu0
    %416 = vmatprep.mubr.f32.mxu0 0.0
    %417 = vmatmul.mubr.f32.gmra.mrb[0].mxu0 %v254
    %v418 = vpop.f32.mrb[0].mxu0
    %v419 = vadd.f32 %v243, %v418
    %v420 = vpop.f32.mrb[0].mxu0
    %421 = vmatprep.mubr.f32.mxu0 0.0
    %422 = vmatmul.mubr.f32.gmra.mrb[0].mxu0 %v257
    %v423 = vpop.f32.mrb[0].mxu0
    %v424 = vadd.f32 %v243, %v423
    %v425 = vpop.f32.mrb[0].mxu0
    %426 = vdwg.mxu0
    %v427 = vmul.f32 %v326, 0.35355338
    %v428 = vmul.f32 %v331, 0.35355338
    %431 = vrot.lane.b32.xlu0 %v427, 120
    %v432 = vpop.permute.xlu0 %431
    %433 = vrot.lane.b32.xlu0 %v428, 120
    %v434 = vpop.permute.xlu0 %433
    %437 = vrot.lane.b32.xlu0 %v427, 112
    %v438 = vpop.permute.xlu0 %437
    %439 = vrot.lane.b32.xlu0 %v428, 112
    %v440 = vpop.permute.xlu0 %439
    %443 = vrot.lane.b32.xlu0 %v427, 104
    %v444 = vpop.permute.xlu0 %443
    %445 = vrot.lane.b32.xlu0 %v428, 104
    %v446 = vpop.permute.xlu0 %445
    %v449 = vcombine.low %v427, %v438
    %v450 = vcombine.high %v427, %v438
    %v452 = vunpack.c.l.s4 1983009808
    %v453 = vunpack.c.0.s8 %v452
    %v454 = vlaneseq
    %v455 = vshrl.u32 %v454, 7
    %v456 = vsub.s32 %v453, %v455
    %v457 = vrot.slane %v449, %v456
    %v459 = vunpack.c.l.s4 1983009808
    %v460 = vunpack.c.0.s8 %v459
    %v461 = vlaneseq
    %v462 = vshrl.u32 %v461, 7
    %v463 = vsub.s32 %v460, %v462
    %v464 = vrot.slane %v450, %v463
    %v465 = vcombine.low %v432, %v444
    %v466 = vcombine.high %v432, %v444
    %v468 = vunpack.c.l.s4 1983009808
    %v469 = vunpack.c.0.s8 %v468
    %v470 = vlaneseq
    %v471 = vshrl.u32 %v470, 7
    %v472 = vsub.s32 %v469, %v471
    %v473 = vrot.slane %v465, %v472
    %v475 = vunpack.c.l.s4 1983009808
    %v476 = vunpack.c.0.s8 %v475
    %v477 = vlaneseq
    %v478 = vshrl.u32 %v477, 7
    %v479 = vsub.s32 %v476, %v478
    %v480 = vrot.slane %v466, %v479
    %v481 = vcombine.low %v457, %v473
    %v482 = vcombine.high %v457, %v473
    %v484 = vunpack.c.l.s4 1934713408
    %v485 = vunpack.c.0.s8 %v484
    %v486 = vlaneseq
    %v487 = vshrl.u32 %v486, 7
    %v488 = vsub.s32 %v485, %v487
    %v489 = vrot.slane %v481, %v488
    %v491 = vunpack.c.l.s4 1934713408
    %v492 = vunpack.c.0.s8 %v491
    %v493 = vlaneseq
    %v494 = vshrl.u32 %v493, 7
    %v495 = vsub.s32 %v492, %v494
    %v496 = vrot.slane %v482, %v495
    %v497 = vcombine.low %v464, %v480
    %v498 = vcombine.high %v464, %v480
    %v500 = vunpack.c.l.s4 1934713408
    %v501 = vunpack.c.0.s8 %v500
    %v502 = vlaneseq
    %v503 = vshrl.u32 %v502, 7
    %v504 = vsub.s32 %v501, %v503
    %v505 = vrot.slane %v497, %v504
    %v507 = vunpack.c.l.s4 1934713408
    %v508 = vunpack.c.0.s8 %v507
    %v509 = vlaneseq
    %v510 = vshrl.u32 %v509, 7
    %v511 = vsub.s32 %v508, %v510
    %v512 = vrot.slane %v498, %v511
    %v513 = vcombine.high %v489, 0.0
    %v514 = vcombine.high %v496, 0.0
    %v515 = vcombine.high %v505, 0.0
    %v516 = vcombine.high %v512, 0.0
    %v517 = vcombine.low %v428, %v440
    %v518 = vcombine.high %v428, %v440
    %v520 = vunpack.c.l.s4 1983009808
    %v521 = vunpack.c.0.s8 %v520
    %v522 = vlaneseq
    %v523 = vshrl.u32 %v522, 7
    %v524 = vsub.s32 %v521, %v523
    %v525 = vrot.slane %v517, %v524
    %v527 = vunpack.c.l.s4 1983009808
    %v528 = vunpack.c.0.s8 %v527
    %v529 = vlaneseq
    %v530 = vshrl.u32 %v529, 7
    %v531 = vsub.s32 %v528, %v530
    %v532 = vrot.slane %v518, %v531
    %v533 = vcombine.low %v434, %v446
    %v534 = vcombine.high %v434, %v446
    %v536 = vunpack.c.l.s4 1983009808
    %v537 = vunpack.c.0.s8 %v536
    %v538 = vlaneseq
    %v539 = vshrl.u32 %v538, 7
    %v540 = vsub.s32 %v537, %v539
    %v541 = vrot.slane %v533, %v540
    %v543 = vunpack.c.l.s4 1983009808
    %v544 = vunpack.c.0.s8 %v543
    %v545 = vlaneseq
    %v546 = vshrl.u32 %v545, 7
    %v547 = vsub.s32 %v544, %v546
    %v548 = vrot.slane %v534, %v547
    %v549 = vcombine.low %v525, %v541
    %v550 = vcombine.high %v525, %v541
    %v552 = vunpack.c.l.s4 1934713408
    %v553 = vunpack.c.0.s8 %v552
    %v554 = vlaneseq
    %v555 = vshrl.u32 %v554, 7
    %v556 = vsub.s32 %v553, %v555
    %v557 = vrot.slane %v549, %v556
    %v559 = vunpack.c.l.s4 1934713408
    %v560 = vunpack.c.0.s8 %v559
    %v561 = vlaneseq
    %v562 = vshrl.u32 %v561, 7
    %v563 = vsub.s32 %v560, %v562
    %v564 = vrot.slane %v550, %v563
    %v565 = vcombine.low %v532, %v548
    %v566 = vcombine.high %v532, %v548
    %v568 = vunpack.c.l.s4 1934713408
    %v569 = vunpack.c.0.s8 %v568
    %v570 = vlaneseq
    %v571 = vshrl.u32 %v570, 7
    %v572 = vsub.s32 %v569, %v571
    %v573 = vrot.slane %v565, %v572
    %v575 = vunpack.c.l.s4 1934713408
    %v576 = vunpack.c.0.s8 %v575
    %v577 = vlaneseq
    %v578 = vshrl.u32 %v577, 7
    %v579 = vsub.s32 %v576, %v578
    %v580 = vrot.slane %v566, %v579
    %v581 = vcombine.high %v557, 0.0
    %v582 = vcombine.high %v564, 0.0
    %v583 = vcombine.high %v573, 0.0
    %v584 = vcombine.high %v580, 0.0
    %v585 = vcombine.low %v489, %v496
    %v587 = vunpack.c.l.s4 1983009808
    %v588 = vunpack.c.0.s8 %v587
    %v589 = vlaneseq
    %v590 = vshrl.u32 %v589, 7
    %v591 = vsub.s32 %v588, %v590
    %v592 = vrot.slane %v585, %v591
    %v593 = vcombine.low %v513, %v514
    %v595 = vunpack.c.l.s4 1983009808
    %v596 = vunpack.c.0.s8 %v595
    %v597 = vlaneseq
    %v598 = vshrl.u32 %v597, 7
    %v599 = vsub.s32 %v596, %v598
    %v600 = vrot.slane %v593, %v599
    %v601 = vcombine.low %v505, %v512
    %v603 = vunpack.c.l.s4 1983009808
    %v604 = vunpack.c.0.s8 %v603
    %v605 = vlaneseq
    %v606 = vshrl.u32 %v605, 7
    %v607 = vsub.s32 %v604, %v606
    %v608 = vrot.slane %v601, %v607
    %v609 = vcombine.low %v515, %v516
    %v611 = vunpack.c.l.s4 1983009808
    %v612 = vunpack.c.0.s8 %v611
    %v613 = vlaneseq
    %v614 = vshrl.u32 %v613, 7
    %v615 = vsub.s32 %v612, %v614
    %v616 = vrot.slane %v609, %v615
    %v617 = vcombine.low %v592, %v600
    %v618 = vcombine.high %v592, %v600
    %v620 = vunpack.c.l.s4 1934713408
    %v621 = vunpack.c.0.s8 %v620
    %v622 = vlaneseq
    %v623 = vshrl.u32 %v622, 7
    %v624 = vsub.s32 %v621, %v623
    %v625 = vrot.slane %v617, %v624
    %v627 = vunpack.c.l.s4 1934713408
    %v628 = vunpack.c.0.s8 %v627
    %v629 = vlaneseq
    %v630 = vshrl.u32 %v629, 7
    %v631 = vsub.s32 %v628, %v630
    %v632 = vrot.slane %v618, %v631
    %v633 = vcombine.low %v608, %v616
    %v634 = vcombine.high %v608, %v616
    %v636 = vunpack.c.l.s4 1934713408
    %v637 = vunpack.c.0.s8 %v636
    %v638 = vlaneseq
    %v639 = vshrl.u32 %v638, 7
    %v640 = vsub.s32 %v637, %v639
    %v641 = vrot.slane %v633, %v640
    %v643 = vunpack.c.l.s4 1934713408
    %v644 = vunpack.c.0.s8 %v643
    %v645 = vlaneseq
    %v646 = vshrl.u32 %v645, 7
    %v647 = vsub.s32 %v644, %v646
    %v648 = vrot.slane %v634, %v647
    %v649 = vcombine.low %v625, %v641
    %v650 = vcombine.high %v625, %v641
    %v651 = vcombine.low %v632, %v648
    %v652 = vcombine.high %v632, %v648
    %v653 = vcombine.low %v557, %v564
    %v655 = vunpack.c.l.s4 1983009808
    %v656 = vunpack.c.0.s8 %v655
    %v657 = vlaneseq
    %v658 = vshrl.u32 %v657, 7
    %v659 = vsub.s32 %v656, %v658
    %v660 = vrot.slane %v653, %v659
    %v661 = vcombine.low %v581, %v582
    %v663 = vunpack.c.l.s4 1983009808
    %v664 = vunpack.c.0.s8 %v663
    %v665 = vlaneseq
    %v666 = vshrl.u32 %v665, 7
    %v667 = vsub.s32 %v664, %v666
    %v668 = vrot.slane %v661, %v667
    %v669 = vcombine.low %v573, %v580
    %v671 = vunpack.c.l.s4 1983009808
    %v672 = vunpack.c.0.s8 %v671
    %v673 = vlaneseq
    %v674 = vshrl.u32 %v673, 7
    %v675 = vsub.s32 %v672, %v674
    %v676 = vrot.slane %v669, %v675
    %v677 = vcombine.low %v583, %v584
    %v679 = vunpack.c.l.s4 1983009808
    %v680 = vunpack.c.0.s8 %v679
    %v681 = vlaneseq
    %v682 = vshrl.u32 %v681, 7
    %v683 = vsub.s32 %v680, %v682
    %v684 = vrot.slane %v677, %v683
    %v685 = vcombine.low %v660, %v668
    %v686 = vcombine.high %v660, %v668
    %v688 = vunpack.c.l.s4 1934713408
    %v689 = vunpack.c.0.s8 %v688
    %v690 = vlaneseq
    %v691 = vshrl.u32 %v690, 7
    %v692 = vsub.s32 %v689, %v691
    %v693 = vrot.slane %v685, %v692
    %v695 = vunpack.c.l.s4 1934713408
    %v696 = vunpack.c.0.s8 %v695
    %v697 = vlaneseq
    %v698 = vshrl.u32 %v697, 7
    %v699 = vsub.s32 %v696, %v698
    %v700 = vrot.slane %v686, %v699
    %v701 = vcombine.low %v676, %v684
    %v702 = vcombine.high %v676, %v684
    %v704 = vunpack.c.l.s4 1934713408
    %v705 = vunpack.c.0.s8 %v704
    %v706 = vlaneseq
    %v707 = vshrl.u32 %v706, 7
    %v708 = vsub.s32 %v705, %v707
    %v709 = vrot.slane %v701, %v708
    %v711 = vunpack.c.l.s4 1934713408
    %v712 = vunpack.c.0.s8 %v711
    %v713 = vlaneseq
    %v714 = vshrl.u32 %v713, 7
    %v715 = vsub.s32 %v712, %v714
    %v716 = vrot.slane %v702, %v715
    %v717 = vcombine.low %v693, %v709
    %v718 = vcombine.high %v693, %v709
    %v719 = vcombine.low %v700, %v716
    %v720 = vcombine.high %v700, %v716
    %723 = vrot.lane.b32.xlu0 %v337, 120
    %v724 = vpop.permute.xlu0 %723
    %725 = vrot.lane.b32.xlu0 %v342, 120
    %v726 = vpop.permute.xlu0 %725
    %729 = vrot.lane.b32.xlu0 %v337, 112
    %v730 = vpop.permute.xlu0 %729
    %731 = vrot.lane.b32.xlu0 %v342, 112
    %v732 = vpop.permute.xlu0 %731
    %735 = vrot.lane.b32.xlu0 %v337, 104
    %v736 = vpop.permute.xlu0 %735
    %737 = vrot.lane.b32.xlu0 %v342, 104
    %v738 = vpop.permute.xlu0 %737
    %v741 = vcombine.low %v337, %v730
    %v742 = vcombine.high %v337, %v730
    %v744 = vunpack.c.l.s4 1983009808
    %v745 = vunpack.c.0.s8 %v744
    %v746 = vlaneseq
    %v747 = vshrl.u32 %v746, 7
    %v748 = vsub.s32 %v745, %v747
    %v749 = vrot.slane %v741, %v748
    %v751 = vunpack.c.l.s4 1983009808
    %v752 = vunpack.c.0.s8 %v751
    %v753 = vlaneseq
    %v754 = vshrl.u32 %v753, 7
    %v755 = vsub.s32 %v752, %v754
    %v756 = vrot.slane %v742, %v755
    %v757 = vcombine.low %v724, %v736
    %v758 = vcombine.high %v724, %v736
    %v760 = vunpack.c.l.s4 1983009808
    %v761 = vunpack.c.0.s8 %v760
    %v762 = vlaneseq
    %v763 = vshrl.u32 %v762, 7
    %v764 = vsub.s32 %v761, %v763
    %v765 = vrot.slane %v757, %v764
    %v767 = vunpack.c.l.s4 1983009808
    %v768 = vunpack.c.0.s8 %v767
    %v769 = vlaneseq
    %v770 = vshrl.u32 %v769, 7
    %v771 = vsub.s32 %v768, %v770
    %v772 = vrot.slane %v758, %v771
    %v773 = vcombine.low %v749, %v765
    %v774 = vcombine.high %v749, %v765
    %v776 = vunpack.c.l.s4 1934713408
    %v777 = vunpack.c.0.s8 %v776
    %v778 = vlaneseq
    %v779 = vshrl.u32 %v778, 7
    %v780 = vsub.s32 %v777, %v779
    %v781 = vrot.slane %v773, %v780
    %v783 = vunpack.c.l.s4 1934713408
    %v784 = vunpack.c.0.s8 %v783
    %v785 = vlaneseq
    %v786 = vshrl.u32 %v785, 7
    %v787 = vsub.s32 %v784, %v786
    %v788 = vrot.slane %v774, %v787
    %v789 = vcombine.low %v756, %v772
    %v790 = vcombine.high %v756, %v772
    %v792 = vunpack.c.l.s4 1934713408
    %v793 = vunpack.c.0.s8 %v792
    %v794 = vlaneseq
    %v795 = vshrl.u32 %v794, 7
    %v796 = vsub.s32 %v793, %v795
    %v797 = vrot.slane %v789, %v796
    %v799 = vunpack.c.l.s4 1934713408
    %v800 = vunpack.c.0.s8 %v799
    %v801 = vlaneseq
    %v802 = vshrl.u32 %v801, 7
    %v803 = vsub.s32 %v800, %v802
    %v804 = vrot.slane %v790, %v803
    %v805 = vcombine.high %v781, 0.0
    %v806 = vcombine.high %v788, 0.0
    %v807 = vcombine.high %v797, 0.0
    %v808 = vcombine.high %v804, 0.0
    %v809 = vcombine.low %v342, %v732
    %v810 = vcombine.high %v342, %v732
    %v812 = vunpack.c.l.s4 1983009808
    %v813 = vunpack.c.0.s8 %v812
    %v814 = vlaneseq
    %v815 = vshrl.u32 %v814, 7
    %v816 = vsub.s32 %v813, %v815
    %v817 = vrot.slane %v809, %v816
    %v819 = vunpack.c.l.s4 1983009808
    %v820 = vunpack.c.0.s8 %v819
    %v821 = vlaneseq
    %v822 = vshrl.u32 %v821, 7
    %v823 = vsub.s32 %v820, %v822
    %v824 = vrot.slane %v810, %v823
    %v825 = vcombine.low %v726, %v738
    %v826 = vcombine.high %v726, %v738
    %v828 = vunpack.c.l.s4 1983009808
    %v829 = vunpack.c.0.s8 %v828
    %v830 = vlaneseq
    %v831 = vshrl.u32 %v830, 7
    %v832 = vsub.s32 %v829, %v831
    %v833 = vrot.slane %v825, %v832
    %v835 = vunpack.c.l.s4 1983009808
    %v836 = vunpack.c.0.s8 %v835
    %v837 = vlaneseq
    %v838 = vshrl.u32 %v837, 7
    %v839 = vsub.s32 %v836, %v838
    %v840 = vrot.slane %v826, %v839
    %v841 = vcombine.low %v817, %v833
    %v842 = vcombine.high %v817, %v833
    %v844 = vunpack.c.l.s4 1934713408
    %v845 = vunpack.c.0.s8 %v844
    %v846 = vlaneseq
    %v847 = vshrl.u32 %v846, 7
    %v848 = vsub.s32 %v845, %v847
    %v849 = vrot.slane %v841, %v848
    %v851 = vunpack.c.l.s4 1934713408
    %v852 = vunpack.c.0.s8 %v851
    %v853 = vlaneseq
    %v854 = vshrl.u32 %v853, 7
    %v855 = vsub.s32 %v852, %v854
    %v856 = vrot.slane %v842, %v855
    %v857 = vcombine.low %v824, %v840
    %v858 = vcombine.high %v824, %v840
    %v860 = vunpack.c.l.s4 1934713408
    %v861 = vunpack.c.0.s8 %v860
    %v862 = vlaneseq
    %v863 = vshrl.u32 %v862, 7
    %v864 = vsub.s32 %v861, %v863
    %v865 = vrot.slane %v857, %v864
    %v867 = vunpack.c.l.s4 1934713408
    %v868 = vunpack.c.0.s8 %v867
    %v869 = vlaneseq
    %v870 = vshrl.u32 %v869, 7
    %v871 = vsub.s32 %v868, %v870
    %v872 = vrot.slane %v858, %v871
    %v873 = vcombine.high %v849, 0.0
    %v874 = vcombine.high %v856, 0.0
    %v875 = vcombine.high %v865, 0.0
    %v876 = vcombine.high %v872, 0.0
    %v877 = vcombine.low %v781, %v788
    %v879 = vunpack.c.l.s4 1983009808
    %v880 = vunpack.c.0.s8 %v879
    %v881 = vlaneseq
    %v882 = vshrl.u32 %v881, 7
    %v883 = vsub.s32 %v880, %v882
    %v884 = vrot.slane %v877, %v883
    %v885 = vcombine.low %v805, %v806
    %v887 = vunpack.c.l.s4 1983009808
    %v888 = vunpack.c.0.s8 %v887
    %v889 = vlaneseq
    %v890 = vshrl.u32 %v889, 7
    %v891 = vsub.s32 %v888, %v890
    %v892 = vrot.slane %v885, %v891
    %v893 = vcombine.low %v797, %v804
    %v895 = vunpack.c.l.s4 1983009808
    %v896 = vunpack.c.0.s8 %v895
    %v897 = vlaneseq
    %v898 = vshrl.u32 %v897, 7
    %v899 = vsub.s32 %v896, %v898
    %v900 = vrot.slane %v893, %v899
    %v901 = vcombine.low %v807, %v808
    %v903 = vunpack.c.l.s4 1983009808
    %v904 = vunpack.c.0.s8 %v903
    %v905 = vlaneseq
    %v906 = vshrl.u32 %v905, 7
    %v907 = vsub.s32 %v904, %v906
    %v908 = vrot.slane %v901, %v907
    %v909 = vcombine.low %v884, %v892
    %v910 = vcombine.high %v884, %v892
    %v912 = vunpack.c.l.s4 1934713408
    %v913 = vunpack.c.0.s8 %v912
    %v914 = vlaneseq
    %v915 = vshrl.u32 %v914, 7
    %v916 = vsub.s32 %v913, %v915
    %v917 = vrot.slane %v909, %v916
    %v919 = vunpack.c.l.s4 1934713408
    %v920 = vunpack.c.0.s8 %v919
    %v921 = vlaneseq
    %v922 = vshrl.u32 %v921, 7
    %v923 = vsub.s32 %v920, %v922
    %v924 = vrot.slane %v910, %v923
    %v925 = vcombine.low %v900, %v908
    %v926 = vcombine.high %v900, %v908
    %v928 = vunpack.c.l.s4 1934713408
    %v929 = vunpack.c.0.s8 %v928
    %v930 = vlaneseq
    %v931 = vshrl.u32 %v930, 7
    %v932 = vsub.s32 %v929, %v931
    %v933 = vrot.slane %v925, %v932
    %v935 = vunpack.c.l.s4 1934713408
    %v936 = vunpack.c.0.s8 %v935
    %v937 = vlaneseq
    %v938 = vshrl.u32 %v937, 7
    %v939 = vsub.s32 %v936, %v938
    %v940 = vrot.slane %v926, %v939
    %v941 = vcombine.low %v917, %v933
    %v942 = vcombine.high %v917, %v933
    %v943 = vcombine.low %v924, %v940
    %v944 = vcombine.high %v924, %v940
    %v945 = vcombine.low %v849, %v856
    %v947 = vunpack.c.l.s4 1983009808
    %v948 = vunpack.c.0.s8 %v947
    %v949 = vlaneseq
    %v950 = vshrl.u32 %v949, 7
    %v951 = vsub.s32 %v948, %v950
    %v952 = vrot.slane %v945, %v951
    %v953 = vcombine.low %v873, %v874
    %v955 = vunpack.c.l.s4 1983009808
    %v956 = vunpack.c.0.s8 %v955
    %v957 = vlaneseq
    %v958 = vshrl.u32 %v957, 7
    %v959 = vsub.s32 %v956, %v958
    %v960 = vrot.slane %v953, %v959
    %v961 = vcombine.low %v865, %v872
    %v963 = vunpack.c.l.s4 1983009808
    %v964 = vunpack.c.0.s8 %v963
    %v965 = vlaneseq
    %v966 = vshrl.u32 %v965, 7
    %v967 = vsub.s32 %v964, %v966
    %v968 = vrot.slane %v961, %v967
    %v969 = vcombine.low %v875, %v876
    %v971 = vunpack.c.l.s4 1983009808
    %v972 = vunpack.c.0.s8 %v971
    %v973 = vlaneseq
    %v974 = vshrl.u32 %v973, 7
    %v975 = vsub.s32 %v972, %v974
    %v976 = vrot.slane %v969, %v975
    %v977 = vcombine.low %v952, %v960
    %v978 = vcombine.high %v952, %v960
    %v980 = vunpack.c.l.s4 1934713408
    %v981 = vunpack.c.0.s8 %v980
    %v982 = vlaneseq
    %v983 = vshrl.u32 %v982, 7
    %v984 = vsub.s32 %v981, %v983
    %v985 = vrot.slane %v977, %v984
    %v987 = vunpack.c.l.s4 1934713408
    %v988 = vunpack.c.0.s8 %v987
    %v989 = vlaneseq
    %v990 = vshrl.u32 %v989, 7
    %v991 = vsub.s32 %v988, %v990
    %v992 = vrot.slane %v978, %v991
    %v993 = vcombine.low %v968, %v976
    %v994 = vcombine.high %v968, %v976
    %v996 = vunpack.c.l.s4 1934713408
    %v997 = vunpack.c.0.s8 %v996
    %v998 = vlaneseq
    %v999 = vshrl.u32 %v998, 7
    %v1000 = vsub.s32 %v997, %v999
    %v1001 = vrot.slane %v993, %v1000
    %v1003 = vunpack.c.l.s4 1934713408
    %v1004 = vunpack.c.0.s8 %v1003
    %v1005 = vlaneseq
    %v1006 = vshrl.u32 %v1005, 7
    %v1007 = vsub.s32 %v1004, %v1006
    %v1008 = vrot.slane %v994, %v1007
    %v1009 = vcombine.low %v985, %v1001
    %v1010 = vcombine.high %v985, %v1001
    %v1011 = vcombine.low %v992, %v1008
    %v1012 = vcombine.high %v992, %v1008
    %1015 = vrot.lane.b32.xlu0 %v419, 120
    %v1016 = vpop.permute.xlu0 %1015
    %1017 = vrot.lane.b32.xlu0 %v424, 120
    %v1018 = vpop.permute.xlu0 %1017
    %1021 = vrot.lane.b32.xlu0 %v419, 112
    %v1022 = vpop.permute.xlu0 %1021
    %1023 = vrot.lane.b32.xlu0 %v424, 112
    %v1024 = vpop.permute.xlu0 %1023
    %1027 = vrot.lane.b32.xlu0 %v419, 104
    %v1028 = vpop.permute.xlu0 %1027
    %1029 = vrot.lane.b32.xlu0 %v424, 104
    %v1030 = vpop.permute.xlu0 %1029
    %v1033 = vcombine.low %v419, %v1022
    %v1034 = vcombine.high %v419, %v1022
    %v1036 = vunpack.c.l.s4 1983009808
    %v1037 = vunpack.c.0.s8 %v1036
    %v1038 = vlaneseq
    %v1039 = vshrl.u32 %v1038, 7
    %v1040 = vsub.s32 %v1037, %v1039
    %v1041 = vrot.slane %v1033, %v1040
    %v1043 = vunpack.c.l.s4 1983009808
    %v1044 = vunpack.c.0.s8 %v1043
    %v1045 = vlaneseq
    %v1046 = vshrl.u32 %v1045, 7
    %v1047 = vsub.s32 %v1044, %v1046
    %v1048 = vrot.slane %v1034, %v1047
    %v1049 = vcombine.low %v1016, %v1028
    %v1050 = vcombine.high %v1016, %v1028
    %v1052 = vunpack.c.l.s4 1983009808
    %v1053 = vunpack.c.0.s8 %v1052
    %v1054 = vlaneseq
    %v1055 = vshrl.u32 %v1054, 7
    %v1056 = vsub.s32 %v1053, %v1055
    %v1057 = vrot.slane %v1049, %v1056
    %v1059 = vunpack.c.l.s4 1983009808
    %v1060 = vunpack.c.0.s8 %v1059
    %v1061 = vlaneseq
    %v1062 = vshrl.u32 %v1061, 7
    %v1063 = vsub.s32 %v1060, %v1062
    %v1064 = vrot.slane %v1050, %v1063
    %v1065 = vcombine.low %v1041, %v1057
    %v1066 = vcombine.high %v1041, %v1057
    %v1068 = vunpack.c.l.s4 1934713408
    %v1069 = vunpack.c.0.s8 %v1068
    %v1070 = vlaneseq
    %v1071 = vshrl.u32 %v1070, 7
    %v1072 = vsub.s32 %v1069, %v1071
    %v1073 = vrot.slane %v1065, %v1072
    %v1075 = vunpack.c.l.s4 1934713408
    %v1076 = vunpack.c.0.s8 %v1075
    %v1077 = vlaneseq
    %v1078 = vshrl.u32 %v1077, 7
    %v1079 = vsub.s32 %v1076, %v1078
    %v1080 = vrot.slane %v1066, %v1079
    %v1081 = vcombine.low %v1048, %v1064
    %v1082 = vcombine.high %v1048, %v1064
    %v1084 = vunpack.c.l.s4 1934713408
    %v1085 = vunpack.c.0.s8 %v1084
    %v1086 = vlaneseq
    %v1087 = vshrl.u32 %v1086, 7
    %v1088 = vsub.s32 %v1085, %v1087
    %v1089 = vrot.slane %v1081, %v1088
    %v1091 = vunpack.c.l.s4 1934713408
    %v1092 = vunpack.c.0.s8 %v1091
    %v1093 = vlaneseq
    %v1094 = vshrl.u32 %v1093, 7
    %v1095 = vsub.s32 %v1092, %v1094
    %v1096 = vrot.slane %v1082, %v1095
    %v1097 = vcombine.high %v1073, 0.0
    %v1098 = vcombine.high %v1080, 0.0
    %v1099 = vcombine.high %v1089, 0.0
    %v1100 = vcombine.high %v1096, 0.0
    %v1101 = vcombine.low %v424, %v1024
    %v1102 = vcombine.high %v424, %v1024
    %v1104 = vunpack.c.l.s4 1983009808
    %v1105 = vunpack.c.0.s8 %v1104
    %v1106 = vlaneseq
    %v1107 = vshrl.u32 %v1106, 7
    %v1108 = vsub.s32 %v1105, %v1107
    %v1109 = vrot.slane %v1101, %v1108
    %v1111 = vunpack.c.l.s4 1983009808
    %v1112 = vunpack.c.0.s8 %v1111
    %v1113 = vlaneseq
    %v1114 = vshrl.u32 %v1113, 7
    %v1115 = vsub.s32 %v1112, %v1114
    %v1116 = vrot.slane %v1102, %v1115
    %v1117 = vcombine.low %v1018, %v1030
    %v1118 = vcombine.high %v1018, %v1030
    %v1120 = vunpack.c.l.s4 1983009808
    %v1121 = vunpack.c.0.s8 %v1120
    %v1122 = vlaneseq
    %v1123 = vshrl.u32 %v1122, 7
    %v1124 = vsub.s32 %v1121, %v1123
    %v1125 = vrot.slane %v1117, %v1124
    %v1127 = vunpack.c.l.s4 1983009808
    %v1128 = vunpack.c.0.s8 %v1127
    %v1129 = vlaneseq
    %v1130 = vshrl.u32 %v1129, 7
    %v1131 = vsub.s32 %v1128, %v1130
    %v1132 = vrot.slane %v1118, %v1131
    %v1133 = vcombine.low %v1109, %v1125
    %v1134 = vcombine.high %v1109, %v1125
    %v1136 = vunpack.c.l.s4 1934713408
    %v1137 = vunpack.c.0.s8 %v1136
    %v1138 = vlaneseq
    %v1139 = vshrl.u32 %v1138, 7
    %v1140 = vsub.s32 %v1137, %v1139
    %v1141 = vrot.slane %v1133, %v1140
    %v1143 = vunpack.c.l.s4 1934713408
    %v1144 = vunpack.c.0.s8 %v1143
    %v1145 = vlaneseq
    %v1146 = vshrl.u32 %v1145, 7
    %v1147 = vsub.s32 %v1144, %v1146
    %v1148 = vrot.slane %v1134, %v1147
    %v1149 = vcombine.low %v1116, %v1132
    %v1150 = vcombine.high %v1116, %v1132
    %v1152 = vunpack.c.l.s4 1934713408
    %v1153 = vunpack.c.0.s8 %v1152
    %v1154 = vlaneseq
    %v1155 = vshrl.u32 %v1154, 7
    %v1156 = vsub.s32 %v1153, %v1155
    %v1157 = vrot.slane %v1149, %v1156
    %v1159 = vunpack.c.l.s4 1934713408
    %v1160 = vunpack.c.0.s8 %v1159
    %v1161 = vlaneseq
    %v1162 = vshrl.u32 %v1161, 7
    %v1163 = vsub.s32 %v1160, %v1162
    %v1164 = vrot.slane %v1150, %v1163
    %v1165 = vcombine.high %v1141, 0.0
    %v1166 = vcombine.high %v1148, 0.0
    %v1167 = vcombine.high %v1157, 0.0
    %v1168 = vcombine.high %v1164, 0.0
    %v1169 = vcombine.low %v1073, %v1080
    %v1171 = vunpack.c.l.s4 1983009808
    %v1172 = vunpack.c.0.s8 %v1171
    %v1173 = vlaneseq
    %v1174 = vshrl.u32 %v1173, 7
    %v1175 = vsub.s32 %v1172, %v1174
    %v1176 = vrot.slane %v1169, %v1175
    %v1177 = vcombine.low %v1097, %v1098
    %v1179 = vunpack.c.l.s4 1983009808
    %v1180 = vunpack.c.0.s8 %v1179
    %v1181 = vlaneseq
    %v1182 = vshrl.u32 %v1181, 7
    %v1183 = vsub.s32 %v1180, %v1182
    %v1184 = vrot.slane %v1177, %v1183
    %v1185 = vcombine.low %v1089, %v1096
    %v1187 = vunpack.c.l.s4 1983009808
    %v1188 = vunpack.c.0.s8 %v1187
    %v1189 = vlaneseq
    %v1190 = vshrl.u32 %v1189, 7
    %v1191 = vsub.s32 %v1188, %v1190
    %v1192 = vrot.slane %v1185, %v1191
    %v1193 = vcombine.low %v1099, %v1100
    %v1195 = vunpack.c.l.s4 1983009808
    %v1196 = vunpack.c.0.s8 %v1195
    %v1197 = vlaneseq
    %v1198 = vshrl.u32 %v1197, 7
    %v1199 = vsub.s32 %v1196, %v1198
    %v1200 = vrot.slane %v1193, %v1199
    %v1201 = vcombine.low %v1176, %v1184
    %v1202 = vcombine.high %v1176, %v1184
    %v1204 = vunpack.c.l.s4 1934713408
    %v1205 = vunpack.c.0.s8 %v1204
    %v1206 = vlaneseq
    %v1207 = vshrl.u32 %v1206, 7
    %v1208 = vsub.s32 %v1205, %v1207
    %v1209 = vrot.slane %v1201, %v1208
    %v1211 = vunpack.c.l.s4 1934713408
    %v1212 = vunpack.c.0.s8 %v1211
    %v1213 = vlaneseq
    %v1214 = vshrl.u32 %v1213, 7
    %v1215 = vsub.s32 %v1212, %v1214
    %v1216 = vrot.slane %v1202, %v1215
    %v1217 = vcombine.low %v1192, %v1200
    %v1218 = vcombine.high %v1192, %v1200
    %v1220 = vunpack.c.l.s4 1934713408
    %v1221 = vunpack.c.0.s8 %v1220
    %v1222 = vlaneseq
    %v1223 = vshrl.u32 %v1222, 7
    %v1224 = vsub.s32 %v1221, %v1223
    %v1225 = vrot.slane %v1217, %v1224
    %v1227 = vunpack.c.l.s4 1934713408
    %v1228 = vunpack.c.0.s8 %v1227
    %v1229 = vlaneseq
    %v1230 = vshrl.u32 %v1229, 7
    %v1231 = vsub.s32 %v1228, %v1230
    %v1232 = vrot.slane %v1218, %v1231
    %v1233 = vcombine.low %v1209, %v1225
    %v1234 = vcombine.high %v1209, %v1225
    %v1235 = vcombine.low %v1216, %v1232
    %v1236 = vcombine.high %v1216, %v1232
    %v1237 = vcombine.low %v1141, %v1148
    %v1239 = vunpack.c.l.s4 1983009808
    %v1240 = vunpack.c.0.s8 %v1239
    %v1241 = vlaneseq
    %v1242 = vshrl.u32 %v1241, 7
    %v1243 = vsub.s32 %v1240, %v1242
    %v1244 = vrot.slane %v1237, %v1243
    %v1245 = vcombine.low %v1165, %v1166
    %v1247 = vunpack.c.l.s4 1983009808
    %v1248 = vunpack.c.0.s8 %v1247
    %v1249 = vlaneseq
    %v1250 = vshrl.u32 %v1249, 7
    %v1251 = vsub.s32 %v1248, %v1250
    %v1252 = vrot.slane %v1245, %v1251
    %v1253 = vcombine.low %v1157, %v1164
    %v1255 = vunpack.c.l.s4 1983009808
    %v1256 = vunpack.c.0.s8 %v1255
    %v1257 = vlaneseq
    %v1258 = vshrl.u32 %v1257, 7
    %v1259 = vsub.s32 %v1256, %v1258
    %v1260 = vrot.slane %v1253, %v1259
    %v1261 = vcombine.low %v1167, %v1168
    %v1263 = vunpack.c.l.s4 1983009808
    %v1264 = vunpack.c.0.s8 %v1263
    %v1265 = vlaneseq
    %v1266 = vshrl.u32 %v1265, 7
    %v1267 = vsub.s32 %v1264, %v1266
    %v1268 = vrot.slane %v1261, %v1267
    %v1269 = vcombine.low %v1244, %v1252
    %v1270 = vcombine.high %v1244, %v1252
    %v1272 = vunpack.c.l.s4 1934713408
    %v1273 = vunpack.c.0.s8 %v1272
    %v1274 = vlaneseq
    %v1275 = vshrl.u32 %v1274, 7
    %v1276 = vsub.s32 %v1273, %v1275
    %v1277 = vrot.slane %v1269, %v1276
    %v1279 = vunpack.c.l.s4 1934713408
    %v1280 = vunpack.c.0.s8 %v1279
    %v1281 = vlaneseq
    %v1282 = vshrl.u32 %v1281, 7
    %v1283 = vsub.s32 %v1280, %v1282
    %v1284 = vrot.slane %v1270, %v1283
    %v1285 = vcombine.low %v1260, %v1268
    %v1286 = vcombine.high %v1260, %v1268
    %v1288 = vunpack.c.l.s4 1934713408
    %v1289 = vunpack.c.0.s8 %v1288
    %v1290 = vlaneseq
    %v1291 = vshrl.u32 %v1290, 7
    %v1292 = vsub.s32 %v1289, %v1291
    %v1293 = vrot.slane %v1285, %v1292
    %v1295 = vunpack.c.l.s4 1934713408
    %v1296 = vunpack.c.0.s8 %v1295
    %v1297 = vlaneseq
    %v1298 = vshrl.u32 %v1297, 7
    %v1299 = vsub.s32 %v1296, %v1298
    %v1300 = vrot.slane %v1286, %v1299
    %v1301 = vcombine.low %v1277, %v1293
    %v1302 = vcombine.high %v1277, %v1293
    %v1303 = vcombine.low %v1284, %v1300
    %v1304 = vcombine.high %v1284, %v1300
    %vm1305 = vcmask 64512
    %v1307 = vsel %vm1305, %v649, 0
    %v1310 = vsel %vm1305, %v941, 0
    %1312 = vmatprep.subr.mxu0 0.0
    %1313 = vmatpush1.xpose.msra.mxu0 %v1310
    %1314 = vmatprep.subr.mxu0 0.0
    %1315 = vmatpush1.xpose.msra.mxu0 0.0
    %1316 = vmatprep.subr.mxu0 0.0
    %1317 = vmatpush1.xpose.msra.mxu0 0.0
    %1318 = vmatprep.subr.mxu0 0.0
    %1319 = vmatpush1.xpose.msra.mxu0 0.0
    %1320 = vmatprep.subr.mxu0 0.0
    %1321 = vmatpush1.xpose.msra.mxu0 0.0
    %1322 = vmatprep.subr.mxu0 0.0
    %1323 = vmatpush1.xpose.msra.mxu0 0.0
    %1324 = vmatprep.subr.mxu0 0.0
    %1325 = vmatpush1.xpose.msra.mxu0 0.0
    %1326 = vmatprep.subr.mxu0 0.0
    %1327 = vmatpush1.xpose.msra.mxu0 0.0
    %1328 = vmatprep.subr.mxu0 0.0
    %1329 = vmatpush1.xpose.msra.mxu0 0.0
    %1330 = vmatprep.subr.mxu0 0.0
    %1331 = vmatpush1.xpose.msra.mxu0 0.0
    %1332 = vmatprep.subr.mxu0 0.0
    %1333 = vmatpush1.xpose.msra.mxu0 0.0
    %1334 = vmatprep.subr.mxu0 0.0
    %1335 = vmatpush1.xpose.msra.mxu0 0.0
    %1336 = vmatprep.subr.mxu0 0.0
    %1337 = vmatpush1.xpose.msra.mxu0 0.0
    %1338 = vmatprep.subr.mxu0 0.0
    %1339 = vmatpush1.xpose.msra.mxu0 0.0
    %1340 = vmatprep.subr.mxu0 0.0
    %1341 = vmatpush1.xpose.msra.mxu0 0.0
    %1342 = vmatprep.subr.mxu0 0.0
    %1343 = vmatpush1.xpose.msra.mxu0 0.0
    %1344 = vmatprep.subr.mxu0 0.0
    %1345 = vmatpush1.xpose.msra.mxu0 0.0
    %1346 = vmatprep.subr.mxu0 0.0
    %1347 = vmatpush1.xpose.msra.mxu0 0.0
    %1348 = vmatprep.subr.mxu0 0.0
    %1349 = vmatpush1.xpose.msra.mxu0 0.0
    %1350 = vmatprep.subr.mxu0 0.0
    %1351 = vmatpush1.xpose.msra.mxu0 0.0
    %1352 = vmatprep.subr.mxu0 0.0
    %1353 = vmatpush1.xpose.msra.mxu0 0.0
    %1354 = vmatprep.subr.mxu0 0.0
    %1355 = vmatpush1.xpose.msra.mxu0 0.0
    %1356 = vmatprep.subr.mxu0 0.0
    %1357 = vmatpush1.xpose.msra.mxu0 0.0
    %1358 = vmatprep.subr.mxu0 0.0
    %1359 = vmatpush1.xpose.msra.mxu0 0.0
    %1360 = vmatprep.subr.mxu0 0.0
    %1361 = vmatpush1.xpose.msra.mxu0 0.0
    %1362 = vmatprep.subr.mxu0 0.0
    %1363 = vmatpush1.xpose.msra.mxu0 0.0
    %1364 = vmatprep.subr.mxu0 0.0
    %1365 = vmatpush1.xpose.msra.mxu0 0.0
    %1366 = vmatprep.subr.mxu0 0.0
    %1367 = vmatpush1.xpose.msra.mxu0 0.0
    %1368 = vmatprep.subr.mxu0 0.0
    %1369 = vmatpush1.xpose.msra.mxu0 0.0
    %1370 = vmatprep.subr.mxu0 0.0
    %1371 = vmatpush1.xpose.msra.mxu0 0.0
    %1372 = vmatprep.subr.mxu0 0.0
    %1373 = vmatpush1.xpose.msra.mxu0 0.0
    %1374 = vmatprep.subr.mxu0 0.0
    %1375 = vmatpush1.xpose.msra.mxu0 0.0
    %1376 = vmatprep.mubr.f32.mxu0 0.0
    %1377 = vmatmul.mubr.f32.gmra.mrb[0].mxu0 %v1307
    %v1378 = vpop.f32.mrb[0].mxu0
    %v1379 = vadd.f32 0.0, %v1378
    %v1380 = vpop.f32.mrb[0].mxu0
    %1381 = vdwg.mxu0
    %v1383 = vsel %vm1305, %v650, 0
    %v1386 = vsel %vm1305, %v942, 0
    %1388 = vmatprep.subr.mxu0 0.0
    %1389 = vmatpush1.xpose.msra.mxu0 %v1386
    %1390 = vmatprep.subr.mxu0 0.0
    %1391 = vmatpush1.xpose.msra.mxu0 0.0
    %1392 = vmatprep.subr.mxu0 0.0
    %1393 = vmatpush1.xpose.msra.mxu0 0.0
    %1394 = vmatprep.subr.mxu0 0.0
    %1395 = vmatpush1.xpose.msra.mxu0 0.0
    %1396 = vmatprep.subr.mxu0 0.0
    %1397 = vmatpush1.xpose.msra.mxu0 0.0
    %1398 = vmatprep.subr.mxu0 0.0
    %1399 = vmatpush1.xpose.msra.mxu0 0.0
    %1400 = vmatprep.subr.mxu0 0.0
    %1401 = vmatpush1.xpose.msra.mxu0 0.0
    %1402 = vmatprep.subr.mxu0 0.0
    %1403 = vmatpush1.xpose.msra.mxu0 0.0
    %1404 = vmatprep.subr.mxu0 0.0
    %1405 = vmatpush1.xpose.msra.mxu0 0.0
    %1406 = vmatprep.subr.mxu0 0.0
    %1407 = vmatpush1.xpose.msra.mxu0 0.0
    %1408 = vmatprep.subr.mxu0 0.0
    %1409 = vmatpush1.xpose.msra.mxu0 0.0
    %1410 = vmatprep.subr.mxu0 0.0
    %1411 = vmatpush1.xpose.msra.mxu0 0.0
    %1412 = vmatprep.subr.mxu0 0.0
    %1413 = vmatpush1.xpose.msra.mxu0 0.0
    %1414 = vmatprep.subr.mxu0 0.0
    %1415 = vmatpush1.xpose.msra.mxu0 0.0
    %1416 = vmatprep.subr.mxu0 0.0
    %1417 = vmatpush1.xpose.msra.mxu0 0.0
    %1418 = vmatprep.subr.mxu0 0.0
    %1419 = vmatpush1.xpose.msra.mxu0 0.0
    %1420 = vmatprep.subr.mxu0 0.0
    %1421 = vmatpush1.xpose.msra.mxu0 0.0
    %1422 = vmatprep.subr.mxu0 0.0
    %1423 = vmatpush1.xpose.msra.mxu0 0.0
    %1424 = vmatprep.subr.mxu0 0.0
    %1425 = vmatpush1.xpose.msra.mxu0 0.0
    %1426 = vmatprep.subr.mxu0 0.0
    %1427 = vmatpush1.xpose.msra.mxu0 0.0
    %1428 = vmatprep.subr.mxu0 0.0
    %1429 = vmatpush1.xpose.msra.mxu0 0.0
    %1430 = vmatprep.subr.mxu0 0.0
    %1431 = vmatpush1.xpose.msra.mxu0 0.0
    %1432 = vmatprep.subr.mxu0 0.0
    %1433 = vmatpush1.xpose.msra.mxu0 0.0
    %1434 = vmatprep.subr.mxu0 0.0
    %1435 = vmatpush1.xpose.msra.mxu0 0.0
    %1436 = vmatprep.subr.mxu0 0.0
    %1437 = vmatpush1.xpose.msra.mxu0 0.0
    %1438 = vmatprep.subr.mxu0 0.0
    %1439 = vmatpush1.xpose.msra.mxu0 0.0
    %1440 = vmatprep.subr.mxu0 0.0
    %1441 = vmatpush1.xpose.msra.mxu0 0.0
    %1442 = vmatprep.subr.mxu0 0.0
    %1443 = vmatpush1.xpose.msra.mxu0 0.0
    %1444 = vmatprep.subr.mxu0 0.0
    %1445 = vmatpush1.xpose.msra.mxu0 0.0
    %1446 = vmatprep.subr.mxu0 0.0
    %1447 = vmatpush1.xpose.msra.mxu0 0.0
    %1448 = vmatprep.subr.mxu0 0.0
    %1449 = vmatpush1.xpose.msra.mxu0 0.0
    %1450 = vmatprep.subr.mxu0 0.0
    %1451 = vmatpush1.xpose.msra.mxu0 0.0
    %1452 = vmatprep.mubr.f32.mxu0 0.0
    %1453 = vmatmul.mubr.f32.gmra.mrb[0].mxu0 %v1383
    %v1454 = vpop.f32.mrb[0].mxu0
    %v1455 = vadd.f32 0.0, %v1454
    %v1456 = vpop.f32.mrb[0].mxu0
    %1457 = vdwg.mxu0
    %v1459 = vsel %vm1305, %v651, 0
    %v1462 = vsel %vm1305, %v943, 0
    %1464 = vmatprep.subr.mxu0 0.0
    %1465 = vmatpush1.xpose.msra.mxu0 %v1462
    %1466 = vmatprep.subr.mxu0 0.0
    %1467 = vmatpush1.xpose.msra.mxu0 0.0
    %1468 = vmatprep.subr.mxu0 0.0
    %1469 = vmatpush1.xpose.msra.mxu0 0.0
    %1470 = vmatprep.subr.mxu0 0.0
    %1471 = vmatpush1.xpose.msra.mxu0 0.0
    %1472 = vmatprep.subr.mxu0 0.0
    %1473 = vmatpush1.xpose.msra.mxu0 0.0
    %1474 = vmatprep.subr.mxu0 0.0
    %1475 = vmatpush1.xpose.msra.mxu0 0.0
    %1476 = vmatprep.subr.mxu0 0.0
    %1477 = vmatpush1.xpose.msra.mxu0 0.0
    %1478 = vmatprep.subr.mxu0 0.0
    %1479 = vmatpush1.xpose.msra.mxu0 0.0
    %1480 = vmatprep.subr.mxu0 0.0
    %1481 = vmatpush1.xpose.msra.mxu0 0.0
    %1482 = vmatprep.subr.mxu0 0.0
    %1483 = vmatpush1.xpose.msra.mxu0 0.0
    %1484 = vmatprep.subr.mxu0 0.0
    %1485 = vmatpush1.xpose.msra.mxu0 0.0
    %1486 = vmatprep.subr.mxu0 0.0
    %1487 = vmatpush1.xpose.msra.mxu0 0.0
    %1488 = vmatprep.subr.mxu0 0.0
    %1489 = vmatpush1.xpose.msra.mxu0 0.0
    %1490 = vmatprep.subr.mxu0 0.0
    %1491 = vmatpush1.xpose.msra.mxu0 0.0
    %1492 = vmatprep.subr.mxu0 0.0
    %1493 = vmatpush1.xpose.msra.mxu0 0.0
    %1494 = vmatprep.subr.mxu0 0.0
    %1495 = vmatpush1.xpose.msra.mxu0 0.0
    %1496 = vmatprep.subr.mxu0 0.0
    %1497 = vmatpush1.xpose.msra.mxu0 0.0
    %1498 = vmatprep.subr.mxu0 0.0
    %1499 = vmatpush1.xpose.msra.mxu0 0.0
    %1500 = vmatprep.subr.mxu0 0.0
    %1501 = vmatpush1.xpose.msra.mxu0 0.0
    %1502 = vmatprep.subr.mxu0 0.0
    %1503 = vmatpush1.xpose.msra.mxu0 0.0
    %1504 = vmatprep.subr.mxu0 0.0
    %1505 = vmatpush1.xpose.msra.mxu0 0.0
    %1506 = vmatprep.subr.mxu0 0.0
    %1507 = vmatpush1.xpose.msra.mxu0 0.0
    %1508 = vmatprep.subr.mxu0 0.0
    %1509 = vmatpush1.xpose.msra.mxu0 0.0
    %1510 = vmatprep.subr.mxu0 0.0
    %1511 = vmatpush1.xpose.msra.mxu0 0.0
    %1512 = vmatprep.subr.mxu0 0.0
    %1513 = vmatpush1.xpose.msra.mxu0 0.0
    %1514 = vmatprep.subr.mxu0 0.0
    %1515 = vmatpush1.xpose.msra.mxu0 0.0
    %1516 = vmatprep.subr.mxu0 0.0
    %1517 = vmatpush1.xpose.msra.mxu0 0.0
    %1518 = vmatprep.subr.mxu0 0.0
    %1519 = vmatpush1.xpose.msra.mxu0 0.0
    %1520 = vmatprep.subr.mxu0 0.0
    %1521 = vmatpush1.xpose.msra.mxu0 0.0
    %1522 = vmatprep.subr.mxu0 0.0
    %1523 = vmatpush1.xpose.msra.mxu0 0.0
    %1524 = vmatprep.subr.mxu0 0.0
    %1525 = vmatpush1.xpose.msra.mxu0 0.0
    %1526 = vmatprep.subr.mxu0 0.0
    %1527 = vmatpush1.xpose.msra.mxu0 0.0
    %1528 = vmatprep.mubr.f32.mxu0 0.0
    %1529 = vmatmul.mubr.f32.gmra.mrb[0].mxu0 %v1459
    %v1530 = vpop.f32.mrb[0].mxu0
    %v1531 = vadd.f32 0.0, %v1530
    %v1532 = vpop.f32.mrb[0].mxu0
    %1533 = vdwg.mxu0
    %v1535 = vsel %vm1305, %v652, 0
    %v1538 = vsel %vm1305, %v944, 0
    %1540 = vmatprep.subr.mxu0 0.0
    %1541 = vmatpush1.xpose.msra.mxu0 %v1538
    %1542 = vmatprep.subr.mxu0 0.0
    %1543 = vmatpush1.xpose.msra.mxu0 0.0
    %1544 = vmatprep.subr.mxu0 0.0
    %1545 = vmatpush1.xpose.msra.mxu0 0.0
    %1546 = vmatprep.subr.mxu0 0.0
    %1547 = vmatpush1.xpose.msra.mxu0 0.0
    %1548 = vmatprep.subr.mxu0 0.0
    %1549 = vmatpush1.xpose.msra.mxu0 0.0
    %1550 = vmatprep.subr.mxu0 0.0
    %1551 = vmatpush1.xpose.msra.mxu0 0.0
    %1552 = vmatprep.subr.mxu0 0.0
    %1553 = vmatpush1.xpose.msra.mxu0 0.0
    %1554 = vmatprep.subr.mxu0 0.0
    %1555 = vmatpush1.xpose.msra.mxu0 0.0
    %1556 = vmatprep.subr.mxu0 0.0
    %1557 = vmatpush1.xpose.msra.mxu0 0.0
    %1558 = vmatprep.subr.mxu0 0.0
    %1559 = vmatpush1.xpose.msra.mxu0 0.0
    %1560 = vmatprep.subr.mxu0 0.0
    %1561 = vmatpush1.xpose.msra.mxu0 0.0
    %1562 = vmatprep.subr.mxu0 0.0
    %1563 = vmatpush1.xpose.msra.mxu0 0.0
    %1564 = vmatprep.subr.mxu0 0.0
    %1565 = vmatpush1.xpose.msra.mxu0 0.0
    %1566 = vmatprep.subr.mxu0 0.0
    %1567 = vmatpush1.xpose.msra.mxu0 0.0
    %1568 = vmatprep.subr.mxu0 0.0
    %1569 = vmatpush1.xpose.msra.mxu0 0.0
    %1570 = vmatprep.subr.mxu0 0.0
    %1571 = vmatpush1.xpose.msra.mxu0 0.0
    %1572 = vmatprep.subr.mxu0 0.0
    %1573 = vmatpush1.xpose.msra.mxu0 0.0
    %1574 = vmatprep.subr.mxu0 0.0
    %1575 = vmatpush1.xpose.msra.mxu0 0.0
    %1576 = vmatprep.subr.mxu0 0.0
    %1577 = vmatpush1.xpose.msra.mxu0 0.0
    %1578 = vmatprep.subr.mxu0 0.0
    %1579 = vmatpush1.xpose.msra.mxu0 0.0
    %1580 = vmatprep.subr.mxu0 0.0
    %1581 = vmatpush1.xpose.msra.mxu0 0.0
    %1582 = vmatprep.subr.mxu0 0.0
    %1583 = vmatpush1.xpose.msra.mxu0 0.0
    %1584 = vmatprep.subr.mxu0 0.0
    %1585 = vmatpush1.xpose.msra.mxu0 0.0
    %1586 = vmatprep.subr.mxu0 0.0
    %1587 = vmatpush1.xpose.msra.mxu0 0.0
    %1588 = vmatprep.subr.mxu0 0.0
    %1589 = vmatpush1.xpose.msra.mxu0 0.0
    %1590 = vmatprep.subr.mxu0 0.0
    %1591 = vmatpush1.xpose.msra.mxu0 0.0
    %1592 = vmatprep.subr.mxu0 0.0
    %1593 = vmatpush1.xpose.msra.mxu0 0.0
    %1594 = vmatprep.subr.mxu0 0.0
    %1595 = vmatpush1.xpose.msra.mxu0 0.0
    %1596 = vmatprep.subr.mxu0 0.0
    %1597 = vmatpush1.xpose.msra.mxu0 0.0
    %1598 = vmatprep.subr.mxu0 0.0
    %1599 = vmatpush1.xpose.msra.mxu0 0.0
    %1600 = vmatprep.subr.mxu0 0.0
    %1601 = vmatpush1.xpose.msra.mxu0 0.0
    %1602 = vmatprep.subr.mxu0 0.0
    %1603 = vmatpush1.xpose.msra.mxu0 0.0
    %1604 = vmatprep.mubr.f32.mxu0 0.0
    %1605 = vmatmul.mubr.f32.gmra.mrb[0].mxu0 %v1535
    %v1606 = vpop.f32.mrb[0].mxu0
    %v1607 = vadd.f32 0.0, %v1606
    %v1608 = vpop.f32.mrb[0].mxu0
    %1609 = vdwg.mxu0
    %v1611 = vsel %vm1305, %v717, 0
    %v1614 = vsel %vm1305, %v1009, 0
    %1616 = vmatprep.subr.mxu0 0.0
    %1617 = vmatpush1.xpose.msra.mxu0 %v1614
    %1618 = vmatprep.subr.mxu0 0.0
    %1619 = vmatpush1.xpose.msra.mxu0 0.0
    %1620 = vmatprep.subr.mxu0 0.0
    %1621 = vmatpush1.xpose.msra.mxu0 0.0
    %1622 = vmatprep.subr.mxu0 0.0
    %1623 = vmatpush1.xpose.msra.mxu0 0.0
    %1624 = vmatprep.subr.mxu0 0.0
    %1625 = vmatpush1.xpose.msra.mxu0 0.0
    %1626 = vmatprep.subr.mxu0 0.0
    %1627 = vmatpush1.xpose.msra.mxu0 0.0
    %1628 = vmatprep.subr.mxu0 0.0
    %1629 = vmatpush1.xpose.msra.mxu0 0.0
    %1630 = vmatprep.subr.mxu0 0.0
    %1631 = vmatpush1.xpose.msra.mxu0 0.0
    %1632 = vmatprep.subr.mxu0 0.0
    %1633 = vmatpush1.xpose.msra.mxu0 0.0
    %1634 = vmatprep.subr.mxu0 0.0
    %1635 = vmatpush1.xpose.msra.mxu0 0.0
    %1636 = vmatprep.subr.mxu0 0.0
    %1637 = vmatpush1.xpose.msra.mxu0 0.0
    %1638 = vmatprep.subr.mxu0 0.0
    %1639 = vmatpush1.xpose.msra.mxu0 0.0
    %1640 = vmatprep.subr.mxu0 0.0
    %1641 = vmatpush1.xpose.msra.mxu0 0.0
    %1642 = vmatprep.subr.mxu0 0.0
    %1643 = vmatpush1.xpose.msra.mxu0 0.0
    %1644 = vmatprep.subr.mxu0 0.0
    %1645 = vmatpush1.xpose.msra.mxu0 0.0
    %1646 = vmatprep.subr.mxu0 0.0
    %1647 = vmatpush1.xpose.msra.mxu0 0.0
    %1648 = vmatprep.subr.mxu0 0.0
    %1649 = vmatpush1.xpose.msra.mxu0 0.0
    %1650 = vmatprep.subr.mxu0 0.0
    %1651 = vmatpush1.xpose.msra.mxu0 0.0
    %1652 = vmatprep.subr.mxu0 0.0
    %1653 = vmatpush1.xpose.msra.mxu0 0.0
    %1654 = vmatprep.subr.mxu0 0.0
    %1655 = vmatpush1.xpose.msra.mxu0 0.0
    %1656 = vmatprep.subr.mxu0 0.0
    %1657 = vmatpush1.xpose.msra.mxu0 0.0
    %1658 = vmatprep.subr.mxu0 0.0
    %1659 = vmatpush1.xpose.msra.mxu0 0.0
    %1660 = vmatprep.subr.mxu0 0.0
    %1661 = vmatpush1.xpose.msra.mxu0 0.0
    %1662 = vmatprep.subr.mxu0 0.0
    %1663 = vmatpush1.xpose.msra.mxu0 0.0
    %1664 = vmatprep.subr.mxu0 0.0
    %1665 = vmatpush1.xpose.msra.mxu0 0.0
    %1666 = vmatprep.subr.mxu0 0.0
    %1667 = vmatpush1.xpose.msra.mxu0 0.0
    %1668 = vmatprep.subr.mxu0 0.0
    %1669 = vmatpush1.xpose.msra.mxu0 0.0
    %1670 = vmatprep.subr.mxu0 0.0
    %1671 = vmatpush1.xpose.msra.mxu0 0.0
    %1672 = vmatprep.subr.mxu0 0.0
    %1673 = vmatpush1.xpose.msra.mxu0 0.0
    %1674 = vmatprep.subr.mxu0 0.0
    %1675 = vmatpush1.xpose.msra.mxu0 0.0
    %1676 = vmatprep.subr.mxu0 0.0
    %1677 = vmatpush1.xpose.msra.mxu0 0.0
    %1678 = vmatprep.subr.mxu0 0.0
    %1679 = vmatpush1.xpose.msra.mxu0 0.0
    %1680 = vmatprep.mubr.f32.mxu0 0.0
    %1681 = vmatmul.mubr.f32.gmra.mrb[0].mxu0 %v1611
    %v1682 = vpop.f32.mrb[0].mxu0
    %v1683 = vadd.f32 0.0, %v1682
    %v1684 = vpop.f32.mrb[0].mxu0
    %1685 = vdwg.mxu0
    %v1687 = vsel %vm1305, %v718, 0
    %v1690 = vsel %vm1305, %v1010, 0
    %1692 = vmatprep.subr.mxu0 0.0
    %1693 = vmatpush1.xpose.msra.mxu0 %v1690
    %1694 = vmatprep.subr.mxu0 0.0
    %1695 = vmatpush1.xpose.msra.mxu0 0.0
    %1696 = vmatprep.subr.mxu0 0.0
    %1697 = vmatpush1.xpose.msra.mxu0 0.0
    %1698 = vmatprep.subr.mxu0 0.0
    %1699 = vmatpush1.xpose.msra.mxu0 0.0
    %1700 = vmatprep.subr.mxu0 0.0
    %1701 = vmatpush1.xpose.msra.mxu0 0.0
    %1702 = vmatprep.subr.mxu0 0.0
    %1703 = vmatpush1.xpose.msra.mxu0 0.0
    %1704 = vmatprep.subr.mxu0 0.0
    %1705 = vmatpush1.xpose.msra.mxu0 0.0
    %1706 = vmatprep.subr.mxu0 0.0
    %1707 = vmatpush1.xpose.msra.mxu0 0.0
    %1708 = vmatprep.subr.mxu0 0.0
    %1709 = vmatpush1.xpose.msra.mxu0 0.0
    %1710 = vmatprep.subr.mxu0 0.0
    %1711 = vmatpush1.xpose.msra.mxu0 0.0
    %1712 = vmatprep.subr.mxu0 0.0
    %1713 = vmatpush1.xpose.msra.mxu0 0.0
    %1714 = vmatprep.subr.mxu0 0.0
    %1715 = vmatpush1.xpose.msra.mxu0 0.0
    %1716 = vmatprep.subr.mxu0 0.0
    %1717 = vmatpush1.xpose.msra.mxu0 0.0
    %1718 = vmatprep.subr.mxu0 0.0
    %1719 = vmatpush1.xpose.msra.mxu0 0.0
    %1720 = vmatprep.subr.mxu0 0.0
    %1721 = vmatpush1.xpose.msra.mxu0 0.0
    %1722 = vmatprep.subr.mxu0 0.0
    %1723 = vmatpush1.xpose.msra.mxu0 0.0
    %1724 = vmatprep.subr.mxu0 0.0
    %1725 = vmatpush1.xpose.msra.mxu0 0.0
    %1726 = vmatprep.subr.mxu0 0.0
    %1727 = vmatpush1.xpose.msra.mxu0 0.0
    %1728 = vmatprep.subr.mxu0 0.0
    %1729 = vmatpush1.xpose.msra.mxu0 0.0
    %1730 = vmatprep.subr.mxu0 0.0
    %1731 = vmatpush1.xpose.msra.mxu0 0.0
    %1732 = vmatprep.subr.mxu0 0.0
    %1733 = vmatpush1.xpose.msra.mxu0 0.0
    %1734 = vmatprep.subr.mxu0 0.0
    %1735 = vmatpush1.xpose.msra.mxu0 0.0
    %1736 = vmatprep.subr.mxu0 0.0
    %1737 = vmatpush1.xpose.msra.mxu0 0.0
    %1738 = vmatprep.subr.mxu0 0.0
    %1739 = vmatpush1.xpose.msra.mxu0 0.0
    %1740 = vmatprep.subr.mxu0 0.0
    %1741 = vmatpush1.xpose.msra.mxu0 0.0
    %1742 = vmatprep.subr.mxu0 0.0
    %1743 = vmatpush1.xpose.msra.mxu0 0.0
    %1744 = vmatprep.subr.mxu0 0.0
    %1745 = vmatpush1.xpose.msra.mxu0 0.0
    %1746 = vmatprep.subr.mxu0 0.0
    %1747 = vmatpush1.xpose.msra.mxu0 0.0
    %1748 = vmatprep.subr.mxu0 0.0
    %1749 = vmatpush1.xpose.msra.mxu0 0.0
    %1750 = vmatprep.subr.mxu0 0.0
    %1751 = vmatpush1.xpose.msra.mxu0 0.0
    %1752 = vmatprep.subr.mxu0 0.0
    %1753 = vmatpush1.xpose.msra.mxu0 0.0
    %1754 = vmatprep.subr.mxu0 0.0
    %1755 = vmatpush1.xpose.msra.mxu0 0.0
    %1756 = vmatprep.mubr.f32.mxu0 0.0
    %1757 = vmatmul.mubr.f32.gmra.mrb[0].mxu0 %v1687
    %v1758 = vpop.f32.mrb[0].mxu0
    %v1759 = vadd.f32 0.0, %v1758
    %v1760 = vpop.f32.mrb[0].mxu0
    %1761 = vdwg.mxu0
    %v1763 = vsel %vm1305, %v719, 0
    %v1766 = vsel %vm1305, %v1011, 0
    %1768 = vmatprep.subr.mxu0 0.0
    %1769 = vmatpush1.xpose.msra.mxu0 %v1766
    %1770 = vmatprep.subr.mxu0 0.0
    %1771 = vmatpush1.xpose.msra.mxu0 0.0
    %1772 = vmatprep.subr.mxu0 0.0
    %1773 = vmatpush1.xpose.msra.mxu0 0.0
    %1774 = vmatprep.subr.mxu0 0.0
    %1775 = vmatpush1.xpose.msra.mxu0 0.0
    %1776 = vmatprep.subr.mxu0 0.0
    %1777 = vmatpush1.xpose.msra.mxu0 0.0
    %1778 = vmatprep.subr.mxu0 0.0
    %1779 = vmatpush1.xpose.msra.mxu0 0.0
    %1780 = vmatprep.subr.mxu0 0.0
    %1781 = vmatpush1.xpose.msra.mxu0 0.0
    %1782 = vmatprep.subr.mxu0 0.0
    %1783 = vmatpush1.xpose.msra.mxu0 0.0
    %1784 = vmatprep.subr.mxu0 0.0
    %1785 = vmatpush1.xpose.msra.mxu0 0.0
    %1786 = vmatprep.subr.mxu0 0.0
    %1787 = vmatpush1.xpose.msra.mxu0 0.0
    %1788 = vmatprep.subr.mxu0 0.0
    %1789 = vmatpush1.xpose.msra.mxu0 0.0
    %1790 = vmatprep.subr.mxu0 0.0
    %1791 = vmatpush1.xpose.msra.mxu0 0.0
    %1792 = vmatprep.subr.mxu0 0.0
    %1793 = vmatpush1.xpose.msra.mxu0 0.0
    %1794 = vmatprep.subr.mxu0 0.0
    %1795 = vmatpush1.xpose.msra.mxu0 0.0
    %1796 = vmatprep.subr.mxu0 0.0
    %1797 = vmatpush1.xpose.msra.mxu0 0.0
    %1798 = vmatprep.subr.mxu0 0.0
    %1799 = vmatpush1.xpose.msra.mxu0 0.0
    %1800 = vmatprep.subr.mxu0 0.0
    %1801 = vmatpush1.xpose.msra.mxu0 0.0
    %1802 = vmatprep.subr.mxu0 0.0
    %1803 = vmatpush1.xpose.msra.mxu0 0.0
    %1804 = vmatprep.subr.mxu0 0.0
    %1805 = vmatpush1.xpose.msra.mxu0 0.0
    %1806 = vmatprep.subr.mxu0 0.0
    %1807 = vmatpush1.xpose.msra.mxu0 0.0
    %1808 = vmatprep.subr.mxu0 0.0
    %1809 = vmatpush1.xpose.msra.mxu0 0.0
    %1810 = vmatprep.subr.mxu0 0.0
    %1811 = vmatpush1.xpose.msra.mxu0 0.0
    %1812 = vmatprep.subr.mxu0 0.0
    %1813 = vmatpush1.xpose.msra.mxu0 0.0
    %1814 = vmatprep.subr.mxu0 0.0
    %1815 = vmatpush1.xpose.msra.mxu0 0.0
    %1816 = vmatprep.subr.mxu0 0.0
    %1817 = vmatpush1.xpose.msra.mxu0 0.0
    %1818 = vmatprep.subr.mxu0 0.0
    %1819 = vmatpush1.xpose.msra.mxu0 0.0
    %1820 = vmatprep.subr.mxu0 0.0
    %1821 = vmatpush1.xpose.msra.mxu0 0.0
    %1822 = vmatprep.subr.mxu0 0.0
    %1823 = vmatpush1.xpose.msra.mxu0 0.0
    %1824 = vmatprep.subr.mxu0 0.0
    %1825 = vmatpush1.xpose.msra.mxu0 0.0
    %1826 = vmatprep.subr.mxu0 0.0
    %1827 = vmatpush1.xpose.msra.mxu0 0.0
    %1828 = vmatprep.subr.mxu0 0.0
    %1829 = vmatpush1.xpose.msra.mxu0 0.0
    %1830 = vmatprep.subr.mxu0 0.0
    %1831 = vmatpush1.xpose.msra.mxu0 0.0
    %1832 = vmatprep.mubr.f32.mxu0 0.0
    %1833 = vmatmul.mubr.f32.gmra.mrb[0].mxu0 %v1763
    %v1834 = vpop.f32.mrb[0].mxu0
    %v1835 = vadd.f32 0.0, %v1834
    %v1836 = vpop.f32.mrb[0].mxu0
    %1837 = vdwg.mxu0
    %v1839 = vsel %vm1305, %v720, 0
    %v1842 = vsel %vm1305, %v1012, 0
    %1844 = vmatprep.subr.mxu0 0.0
    %1845 = vmatpush1.xpose.msra.mxu0 %v1842
    %1846 = vmatprep.subr.mxu0 0.0
    %1847 = vmatpush1.xpose.msra.mxu0 0.0
    %1848 = vmatprep.subr.mxu0 0.0
    %1849 = vmatpush1.xpose.msra.mxu0 0.0
    %1850 = vmatprep.subr.mxu0 0.0
    %1851 = vmatpush1.xpose.msra.mxu0 0.0
    %1852 = vmatprep.subr.mxu0 0.0
    %1853 = vmatpush1.xpose.msra.mxu0 0.0
    %1854 = vmatprep.subr.mxu0 0.0
    %1855 = vmatpush1.xpose.msra.mxu0 0.0
    %1856 = vmatprep.subr.mxu0 0.0
    %1857 = vmatpush1.xpose.msra.mxu0 0.0
    %1858 = vmatprep.subr.mxu0 0.0
    %1859 = vmatpush1.xpose.msra.mxu0 0.0
    %1860 = vmatprep.subr.mxu0 0.0
    %1861 = vmatpush1.xpose.msra.mxu0 0.0
    %1862 = vmatprep.subr.mxu0 0.0
    %1863 = vmatpush1.xpose.msra.mxu0 0.0
    %1864 = vmatprep.subr.mxu0 0.0
    %1865 = vmatpush1.xpose.msra.mxu0 0.0
    %1866 = vmatprep.subr.mxu0 0.0
    %1867 = vmatpush1.xpose.msra.mxu0 0.0
    %1868 = vmatprep.subr.mxu0 0.0
    %1869 = vmatpush1.xpose.msra.mxu0 0.0
    %1870 = vmatprep.subr.mxu0 0.0
    %1871 = vmatpush1.xpose.msra.mxu0 0.0
    %1872 = vmatprep.subr.mxu0 0.0
    %1873 = vmatpush1.xpose.msra.mxu0 0.0
    %1874 = vmatprep.subr.mxu0 0.0
    %1875 = vmatpush1.xpose.msra.mxu0 0.0
    %1876 = vmatprep.subr.mxu0 0.0
    %1877 = vmatpush1.xpose.msra.mxu0 0.0
    %1878 = vmatprep.subr.mxu0 0.0
    %1879 = vmatpush1.xpose.msra.mxu0 0.0
    %1880 = vmatprep.subr.mxu0 0.0
    %1881 = vmatpush1.xpose.msra.mxu0 0.0
    %1882 = vmatprep.subr.mxu0 0.0
    %1883 = vmatpush1.xpose.msra.mxu0 0.0
    %1884 = vmatprep.subr.mxu0 0.0
    %1885 = vmatpush1.xpose.msra.mxu0 0.0
    %1886 = vmatprep.subr.mxu0 0.0
    %1887 = vmatpush1.xpose.msra.mxu0 0.0
    %1888 = vmatprep.subr.mxu0 0.0
    %1889 = vmatpush1.xpose.msra.mxu0 0.0
    %1890 = vmatprep.subr.mxu0 0.0
    %1891 = vmatpush1.xpose.msra.mxu0 0.0
    %1892 = vmatprep.subr.mxu0 0.0
    %1893 = vmatpush1.xpose.msra.mxu0 0.0
    %1894 = vmatprep.subr.mxu0 0.0
    %1895 = vmatpush1.xpose.msra.mxu0 0.0
    %1896 = vmatprep.subr.mxu0 0.0
    %1897 = vmatpush1.xpose.msra.mxu0 0.0
    %1898 = vmatprep.subr.mxu0 0.0
    %1899 = vmatpush1.xpose.msra.mxu0 0.0
    %1900 = vmatprep.subr.mxu0 0.0
    %1901 = vmatpush1.xpose.msra.mxu0 0.0
    %1902 = vmatprep.subr.mxu0 0.0
    %1903 = vmatpush1.xpose.msra.mxu0 0.0
    %1904 = vmatprep.subr.mxu0 0.0
    %1905 = vmatpush1.xpose.msra.mxu0 0.0
    %1906 = vmatprep.subr.mxu0 0.0
    %1907 = vmatpush1.xpose.msra.mxu0 0.0
    %1908 = vmatprep.mubr.f32.mxu0 0.0
    %1909 = vmatmul.mubr.f32.gmra.mrb[0].mxu0 %v1839
    %v1910 = vpop.f32.mrb[0].mxu0
    %v1911 = vadd.f32 0.0, %v1910
    %v1912 = vpop.f32.mrb[0].mxu0
    %1913 = vdwg.mxu0
    %v1914 = vsel %vm1305, %v1379, -inf
    %1915 = vmax.xlane.f32.xlu0 %v1914
    %v1916 = vpop.xlane.xlu0 %1915
    %v1917 = vsel %vm1305, %v1455, -inf
    %1918 = vmax.xlane.f32.xlu0 %v1917
    %v1919 = vpop.xlane.xlu0 %1918
    %v1920 = vsel %vm1305, %v1531, -inf
    %1921 = vmax.xlane.f32.xlu0 %v1920
    %v1922 = vpop.xlane.xlu0 %1921
    %v1923 = vsel %vm1305, %v1607, -inf
    %1924 = vmax.xlane.f32.xlu0 %v1923
    %v1925 = vpop.xlane.xlu0 %1924
    %v1926 = vsel %vm1305, %v1683, -inf
    %1927 = vmax.xlane.f32.xlu0 %v1926
    %v1928 = vpop.xlane.xlu0 %1927
    %v1929 = vsel %vm1305, %v1759, -inf
    %1930 = vmax.xlane.f32.xlu0 %v1929
    %v1931 = vpop.xlane.xlu0 %1930
    %v1932 = vsel %vm1305, %v1835, -inf
    %1933 = vmax.xlane.f32.xlu0 %v1932
    %v1934 = vpop.xlane.xlu0 %1933
    %v1935 = vsel %vm1305, %v1911, -inf
    %1936 = vmax.xlane.f32.xlu0 %v1935
    %v1937 = vpop.xlane.xlu0 %1936
    %v1938 = vsub.f32 %v1379, %v1916
    %v1939 = vsub.f32 %v1455, %v1919
    %v1940 = vsub.f32 %v1531, %v1922
    %v1941 = vsub.f32 %v1607, %v1925
    %v1942 = vsub.f32 %v1683, %v1928
    %v1943 = vsub.f32 %v1759, %v1931
    %v1944 = vsub.f32 %v1835, %v1934
    %v1945 = vsub.f32 %v1911, %v1937
    %v1946 = vmul.f32 %v1938, 1.442695
    %v1947 = vpow.pop %v1946
    %v1948 = vmul.f32 %v1939, 1.442695
    %v1949 = vpow.pop %v1948
    %v1950 = vmul.f32 %v1940, 1.442695
    %v1951 = vpow.pop %v1950
    %v1952 = vmul.f32 %v1941, 1.442695
    %v1953 = vpow.pop %v1952
    %v1954 = vmul.f32 %v1942, 1.442695
    %v1955 = vpow.pop %v1954
    %v1956 = vmul.f32 %v1943, 1.442695
    %v1957 = vpow.pop %v1956
    %v1958 = vmul.f32 %v1944, 1.442695
    %v1959 = vpow.pop %v1958
    %v1960 = vmul.f32 %v1945, 1.442695
    %v1961 = vpow.pop %v1960
    %v1962 = vsel %vm1305, %v1947, 0.0
    %1963 = vadd.xlane.f32.xlu0 %v1962
    %v1964 = vpop.xlane.xlu0 %1963
    %v1965 = vsel %vm1305, %v1949, 0.0
    %1966 = vadd.xlane.f32.xlu0 %v1965
    %v1967 = vpop.xlane.xlu0 %1966
    %v1968 = vsel %vm1305, %v1951, 0.0
    %1969 = vadd.xlane.f32.xlu0 %v1968
    %v1970 = vpop.xlane.xlu0 %1969
    %v1971 = vsel %vm1305, %v1953, 0.0
    %1972 = vadd.xlane.f32.xlu0 %v1971
    %v1973 = vpop.xlane.xlu0 %1972
    %v1974 = vsel %vm1305, %v1955, 0.0
    %1975 = vadd.xlane.f32.xlu0 %v1974
    %v1976 = vpop.xlane.xlu0 %1975
    %v1977 = vsel %vm1305, %v1957, 0.0
    %1978 = vadd.xlane.f32.xlu0 %v1977
    %v1979 = vpop.xlane.xlu0 %1978
    %v1980 = vsel %vm1305, %v1959, 0.0
    %1981 = vadd.xlane.f32.xlu0 %v1980
    %v1982 = vpop.xlane.xlu0 %1981
    %v1983 = vsel %vm1305, %v1961, 0.0
    %1984 = vadd.xlane.f32.xlu0 %v1983
    %v1985 = vpop.xlane.xlu0 %1984
    %v1986 = vrcp.pop %v1964
    %v1987 = vmul.f32 %v1947, %v1986
    %v1988 = vrcp.pop %v1967
    %v1989 = vmul.f32 %v1949, %v1988
    %v1990 = vrcp.pop %v1970
    %v1991 = vmul.f32 %v1951, %v1990
    %v1992 = vrcp.pop %v1973
    %v1993 = vmul.f32 %v1953, %v1992
    %v1994 = vrcp.pop %v1976
    %v1995 = vmul.f32 %v1955, %v1994
    %v1996 = vrcp.pop %v1979
    %v1997 = vmul.f32 %v1957, %v1996
    %v1998 = vrcp.pop %v1982
    %v1999 = vmul.f32 %v1959, %v1998
    %v2000 = vrcp.pop %v1985
    %v2001 = vmul.f32 %v1961, %v2000
    %v2003 = vsel %vm1305, %v1987, 0
    %2005 = vmatprep.subr.mxu0 0.0
    %2006 = vmatpush1.msra.mxu0 %v1233
    %2007 = vmatprep.subr.mxu0 0.0
    %2008 = vmatpush1.msra.mxu0 0.0
    %2009 = vmatprep.subr.mxu0 0.0
    %2010 = vmatpush1.msra.mxu0 0.0
    %2011 = vmatprep.subr.mxu0 0.0
    %2012 = vmatpush1.msra.mxu0 0.0
    %2013 = vmatprep.subr.mxu0 0.0
    %2014 = vmatpush1.msra.mxu0 0.0
    %2015 = vmatprep.subr.mxu0 0.0
    %2016 = vmatpush1.msra.mxu0 0.0
    %2017 = vmatprep.subr.mxu0 0.0
    %2018 = vmatpush1.msra.mxu0 0.0
    %2019 = vmatprep.subr.mxu0 0.0
    %2020 = vmatpush1.msra.mxu0 0.0
    %2021 = vmatprep.subr.mxu0 0.0
    %2022 = vmatpush1.msra.mxu0 0.0
    %2023 = vmatprep.subr.mxu0 0.0
    %2024 = vmatpush1.msra.mxu0 0.0
    %2025 = vmatprep.subr.mxu0 0.0
    %2026 = vmatpush1.msra.mxu0 0.0
    %2027 = vmatprep.subr.mxu0 0.0
    %2028 = vmatpush1.msra.mxu0 0.0
    %2029 = vmatprep.subr.mxu0 0.0
    %2030 = vmatpush1.msra.mxu0 0.0
    %2031 = vmatprep.subr.mxu0 0.0
    %2032 = vmatpush1.msra.mxu0 0.0
    %2033 = vmatprep.subr.mxu0 0.0
    %2034 = vmatpush1.msra.mxu0 0.0
    %2035 = vmatprep.subr.mxu0 0.0
    %2036 = vmatpush1.msra.mxu0 0.0
    %2037 = vmatprep.subr.mxu0 0.0
    %2038 = vmatpush1.msra.mxu0 0.0
    %2039 = vmatprep.subr.mxu0 0.0
    %2040 = vmatpush1.msra.mxu0 0.0
    %2041 = vmatprep.subr.mxu0 0.0
    %2042 = vmatpush1.msra.mxu0 0.0
    %2043 = vmatprep.subr.mxu0 0.0
    %2044 = vmatpush1.msra.mxu0 0.0
    %2045 = vmatprep.subr.mxu0 0.0
    %2046 = vmatpush1.msra.mxu0 0.0
    %2047 = vmatprep.subr.mxu0 0.0
    %2048 = vmatpush1.msra.mxu0 0.0
    %2049 = vmatprep.subr.mxu0 0.0
    %2050 = vmatpush1.msra.mxu0 0.0
    %2051 = vmatprep.subr.mxu0 0.0
    %2052 = vmatpush1.msra.mxu0 0.0
    %2053 = vmatprep.subr.mxu0 0.0
    %2054 = vmatpush1.msra.mxu0 0.0
    %2055 = vmatprep.subr.mxu0 0.0
    %2056 = vmatpush1.msra.mxu0 0.0
    %2057 = vmatprep.subr.mxu0 0.0
    %2058 = vmatpush1.msra.mxu0 0.0
    %2059 = vmatprep.subr.mxu0 0.0
    %2060 = vmatpush1.msra.mxu0 0.0
    %2061 = vmatprep.subr.mxu0 0.0
    %2062 = vmatpush1.msra.mxu0 0.0
    %2063 = vmatprep.subr.mxu0 0.0
    %2064 = vmatpush1.msra.mxu0 0.0
    %2065 = vmatprep.subr.mxu0 0.0
    %2066 = vmatpush1.msra.mxu0 0.0
    %2067 = vmatprep.subr.mxu0 0.0
    %2068 = vmatpush1.msra.mxu0 0.0
    %2069 = vmatprep.mubr.f32.mxu0 0.0
    %2070 = vmatmul.mubr.f32.gmra.mrb[0].mxu0 %v2003
    %v2071 = vpop.f32.mrb[0].mxu0
    %v2072 = vadd.f32 0.0, %v2071
    %v2073 = vpop.f32.mrb[0].mxu0
    %2074 = vdwg.mxu0
    %v2076 = vsel %vm1305, %v1989, 0
    %2078 = vmatprep.subr.mxu0 0.0
    %2079 = vmatpush1.msra.mxu0 %v1234
    %2080 = vmatprep.subr.mxu0 0.0
    %2081 = vmatpush1.msra.mxu0 0.0
    %2082 = vmatprep.subr.mxu0 0.0
    %2083 = vmatpush1.msra.mxu0 0.0
    %2084 = vmatprep.subr.mxu0 0.0
    %2085 = vmatpush1.msra.mxu0 0.0
    %2086 = vmatprep.subr.mxu0 0.0
    %2087 = vmatpush1.msra.mxu0 0.0
    %2088 = vmatprep.subr.mxu0 0.0
    %2089 = vmatpush1.msra.mxu0 0.0
    %2090 = vmatprep.subr.mxu0 0.0
    %2091 = vmatpush1.msra.mxu0 0.0
    %2092 = vmatprep.subr.mxu0 0.0
    %2093 = vmatpush1.msra.mxu0 0.0
    %2094 = vmatprep.subr.mxu0 0.0
    %2095 = vmatpush1.msra.mxu0 0.0
    %2096 = vmatprep.subr.mxu0 0.0
    %2097 = vmatpush1.msra.mxu0 0.0
    %2098 = vmatprep.subr.mxu0 0.0
    %2099 = vmatpush1.msra.mxu0 0.0
    %2100 = vmatprep.subr.mxu0 0.0
    %2101 = vmatpush1.msra.mxu0 0.0
    %2102 = vmatprep.subr.mxu0 0.0
    %2103 = vmatpush1.msra.mxu0 0.0
    %2104 = vmatprep.subr.mxu0 0.0
    %2105 = vmatpush1.msra.mxu0 0.0
    %2106 = vmatprep.subr.mxu0 0.0
    %2107 = vmatpush1.msra.mxu0 0.0
    %2108 = vmatprep.subr.mxu0 0.0
    %2109 = vmatpush1.msra.mxu0 0.0
    %2110 = vmatprep.subr.mxu0 0.0
    %2111 = vmatpush1.msra.mxu0 0.0
    %2112 = vmatprep.subr.mxu0 0.0
    %2113 = vmatpush1.msra.mxu0 0.0
    %2114 = vmatprep.subr.mxu0 0.0
    %2115 = vmatpush1.msra.mxu0 0.0
    %2116 = vmatprep.subr.mxu0 0.0
    %2117 = vmatpush1.msra.mxu0 0.0
    %2118 = vmatprep.subr.mxu0 0.0
    %2119 = vmatpush1.msra.mxu0 0.0
    %2120 = vmatprep.subr.mxu0 0.0
    %2121 = vmatpush1.msra.mxu0 0.0
    %2122 = vmatprep.subr.mxu0 0.0
    %2123 = vmatpush1.msra.mxu0 0.0
    %2124 = vmatprep.subr.mxu0 0.0
    %2125 = vmatpush1.msra.mxu0 0.0
    %2126 = vmatprep.subr.mxu0 0.0
    %2127 = vmatpush1.msra.mxu0 0.0
    %2128 = vmatprep.subr.mxu0 0.0
    %2129 = vmatpush1.msra.mxu0 0.0
    %2130 = vmatprep.subr.mxu0 0.0
    %2131 = vmatpush1.msra.mxu0 0.0
    %2132 = vmatprep.subr.mxu0 0.0
    %2133 = vmatpush1.msra.mxu0 0.0
    %2134 = vmatprep.subr.mxu0 0.0
    %2135 = vmatpush1.msra.mxu0 0.0
    %2136 = vmatprep.subr.mxu0 0.0
    %2137 = vmatpush1.msra.mxu0 0.0
    %2138 = vmatprep.subr.mxu0 0.0
    %2139 = vmatpush1.msra.mxu0 0.0
    %2140 = vmatprep.subr.mxu0 0.0
    %2141 = vmatpush1.msra.mxu0 0.0
    %2142 = vmatprep.mubr.f32.mxu0 0.0
    %2143 = vmatmul.mubr.f32.gmra.mrb[0].mxu0 %v2076
    %v2144 = vpop.f32.mrb[0].mxu0
    %v2145 = vadd.f32 0.0, %v2144
    %v2146 = vpop.f32.mrb[0].mxu0
    %2147 = vdwg.mxu0
    %v2149 = vsel %vm1305, %v1991, 0
    %2151 = vmatprep.subr.mxu0 0.0
    %2152 = vmatpush1.msra.mxu0 %v1235
    %2153 = vmatprep.subr.mxu0 0.0
    %2154 = vmatpush1.msra.mxu0 0.0
    %2155 = vmatprep.subr.mxu0 0.0
    %2156 = vmatpush1.msra.mxu0 0.0
    %2157 = vmatprep.subr.mxu0 0.0
    %2158 = vmatpush1.msra.mxu0 0.0
    %2159 = vmatprep.subr.mxu0 0.0
    %2160 = vmatpush1.msra.mxu0 0.0
    %2161 = vmatprep.subr.mxu0 0.0
    %2162 = vmatpush1.msra.mxu0 0.0
    %2163 = vmatprep.subr.mxu0 0.0
    %2164 = vmatpush1.msra.mxu0 0.0
    %2165 = vmatprep.subr.mxu0 0.0
    %2166 = vmatpush1.msra.mxu0 0.0
    %2167 = vmatprep.subr.mxu0 0.0
    %2168 = vmatpush1.msra.mxu0 0.0
    %2169 = vmatprep.subr.mxu0 0.0
    %2170 = vmatpush1.msra.mxu0 0.0
    %2171 = vmatprep.subr.mxu0 0.0
    %2172 = vmatpush1.msra.mxu0 0.0
    %2173 = vmatprep.subr.mxu0 0.0
    %2174 = vmatpush1.msra.mxu0 0.0
    %2175 = vmatprep.subr.mxu0 0.0
    %2176 = vmatpush1.msra.mxu0 0.0
    %2177 = vmatprep.subr.mxu0 0.0
    %2178 = vmatpush1.msra.mxu0 0.0
    %2179 = vmatprep.subr.mxu0 0.0
    %2180 = vmatpush1.msra.mxu0 0.0
    %2181 = vmatprep.subr.mxu0 0.0
    %2182 = vmatpush1.msra.mxu0 0.0
    %2183 = vmatprep.subr.mxu0 0.0
    %2184 = vmatpush1.msra.mxu0 0.0
    %2185 = vmatprep.subr.mxu0 0.0
    %2186 = vmatpush1.msra.mxu0 0.0
    %2187 = vmatprep.subr.mxu0 0.0
    %2188 = vmatpush1.msra.mxu0 0.0
    %2189 = vmatprep.subr.mxu0 0.0
    %2190 = vmatpush1.msra.mxu0 0.0
    %2191 = vmatprep.subr.mxu0 0.0
    %2192 = vmatpush1.msra.mxu0 0.0
    %2193 = vmatprep.subr.mxu0 0.0
    %2194 = vmatpush1.msra.mxu0 0.0
    %2195 = vmatprep.subr.mxu0 0.0
    %2196 = vmatpush1.msra.mxu0 0.0
    %2197 = vmatprep.subr.mxu0 0.0
    %2198 = vmatpush1.msra.mxu0 0.0
    %2199 = vmatprep.subr.mxu0 0.0
    %2200 = vmatpush1.msra.mxu0 0.0
    %2201 = vmatprep.subr.mxu0 0.0
    %2202 = vmatpush1.msra.mxu0 0.0
    %2203 = vmatprep.subr.mxu0 0.0
    %2204 = vmatpush1.msra.mxu0 0.0
    %2205 = vmatprep.subr.mxu0 0.0
    %2206 = vmatpush1.msra.mxu0 0.0
    %2207 = vmatprep.subr.mxu0 0.0
    %2208 = vmatpush1.msra.mxu0 0.0
    %2209 = vmatprep.subr.mxu0 0.0
    %2210 = vmatpush1.msra.mxu0 0.0
    %2211 = vmatprep.subr.mxu0 0.0
    %2212 = vmatpush1.msra.mxu0 0.0
    %2213 = vmatprep.subr.mxu0 0.0
    %2214 = vmatpush1.msra.mxu0 0.0
    %2215 = vmatprep.mubr.f32.mxu0 0.0
    %2216 = vmatmul.mubr.f32.gmra.mrb[0].mxu0 %v2149
    %v2217 = vpop.f32.mrb[0].mxu0
    %v2218 = vadd.f32 0.0, %v2217
    %v2219 = vpop.f32.mrb[0].mxu0
    %2220 = vdwg.mxu0
    %v2222 = vsel %vm1305, %v1993, 0
    %2224 = vmatprep.subr.mxu0 0.0
    %2225 = vmatpush1.msra.mxu0 %v1236
    %2226 = vmatprep.subr.mxu0 0.0
    %2227 = vmatpush1.msra.mxu0 0.0
    %2228 = vmatprep.subr.mxu0 0.0
    %2229 = vmatpush1.msra.mxu0 0.0
    %2230 = vmatprep.subr.mxu0 0.0
    %2231 = vmatpush1.msra.mxu0 0.0
    %2232 = vmatprep.subr.mxu0 0.0
    %2233 = vmatpush1.msra.mxu0 0.0
    %2234 = vmatprep.subr.mxu0 0.0
    %2235 = vmatpush1.msra.mxu0 0.0
    %2236 = vmatprep.subr.mxu0 0.0
    %2237 = vmatpush1.msra.mxu0 0.0
    %2238 = vmatprep.subr.mxu0 0.0
    %2239 = vmatpush1.msra.mxu0 0.0
    %2240 = vmatprep.subr.mxu0 0.0
    %2241 = vmatpush1.msra.mxu0 0.0
    %2242 = vmatprep.subr.mxu0 0.0
    %2243 = vmatpush1.msra.mxu0 0.0
    %2244 = vmatprep.subr.mxu0 0.0
    %2245 = vmatpush1.msra.mxu0 0.0
    %2246 = vmatprep.subr.mxu0 0.0
    %2247 = vmatpush1.msra.mxu0 0.0
    %2248 = vmatprep.subr.mxu0 0.0
    %2249 = vmatpush1.msra.mxu0 0.0
    %2250 = vmatprep.subr.mxu0 0.0
    %2251 = vmatpush1.msra.mxu0 0.0
    %2252 = vmatprep.subr.mxu0 0.0
    %2253 = vmatpush1.msra.mxu0 0.0
    %2254 = vmatprep.subr.mxu0 0.0
    %2255 = vmatpush1.msra.mxu0 0.0
    %2256 = vmatprep.subr.mxu0 0.0
    %2257 = vmatpush1.msra.mxu0 0.0
    %2258 = vmatprep.subr.mxu0 0.0
    %2259 = vmatpush1.msra.mxu0 0.0
    %2260 = vmatprep.subr.mxu0 0.0
    %2261 = vmatpush1.msra.mxu0 0.0
    %2262 = vmatprep.subr.mxu0 0.0
    %2263 = vmatpush1.msra.mxu0 0.0
    %2264 = vmatprep.subr.mxu0 0.0
    %2265 = vmatpush1.msra.mxu0 0.0
    %2266 = vmatprep.subr.mxu0 0.0
    %2267 = vmatpush1.msra.mxu0 0.0
    %2268 = vmatprep.subr.mxu0 0.0
    %2269 = vmatpush1.msra.mxu0 0.0
    %2270 = vmatprep.subr.mxu0 0.0
    %2271 = vmatpush1.msra.mxu0 0.0
    %2272 = vmatprep.subr.mxu0 0.0
    %2273 = vmatpush1.msra.mxu0 0.0
    %2274 = vmatprep.subr.mxu0 0.0
    %2275 = vmatpush1.msra.mxu0 0.0
    %2276 = vmatprep.subr.mxu0 0.0
    %2277 = vmatpush1.msra.mxu0 0.0
    %2278 = vmatprep.subr.mxu0 0.0
    %2279 = vmatpush1.msra.mxu0 0.0
    %2280 = vmatprep.subr.mxu0 0.0
    %2281 = vmatpush1.msra.mxu0 0.0
    %2282 = vmatprep.subr.mxu0 0.0
    %2283 = vmatpush1.msra.mxu0 0.0
    %2284 = vmatprep.subr.mxu0 0.0
    %2285 = vmatpush1.msra.mxu0 0.0
    %2286 = vmatprep.subr.mxu0 0.0
    %2287 = vmatpush1.msra.mxu0 0.0
    %2288 = vmatprep.mubr.f32.mxu0 0.0
    %2289 = vmatmul.mubr.f32.gmra.mrb[0].mxu0 %v2222
    %v2290 = vpop.f32.mrb[0].mxu0
    %v2291 = vadd.f32 0.0, %v2290
    %v2292 = vpop.f32.mrb[0].mxu0
    %2293 = vdwg.mxu0
    %v2295 = vsel %vm1305, %v1995, 0
    %2297 = vmatprep.subr.mxu0 0.0
    %2298 = vmatpush1.msra.mxu0 %v1301
    %2299 = vmatprep.subr.mxu0 0.0
    %2300 = vmatpush1.msra.mxu0 0.0
    %2301 = vmatprep.subr.mxu0 0.0
    %2302 = vmatpush1.msra.mxu0 0.0
    %2303 = vmatprep.subr.mxu0 0.0
    %2304 = vmatpush1.msra.mxu0 0.0
    %2305 = vmatprep.subr.mxu0 0.0
    %2306 = vmatpush1.msra.mxu0 0.0
    %2307 = vmatprep.subr.mxu0 0.0
    %2308 = vmatpush1.msra.mxu0 0.0
    %2309 = vmatprep.subr.mxu0 0.0
    %2310 = vmatpush1.msra.mxu0 0.0
    %2311 = vmatprep.subr.mxu0 0.0
    %2312 = vmatpush1.msra.mxu0 0.0
    %2313 = vmatprep.subr.mxu0 0.0
    %2314 = vmatpush1.msra.mxu0 0.0
    %2315 = vmatprep.subr.mxu0 0.0
    %2316 = vmatpush1.msra.mxu0 0.0
    %2317 = vmatprep.subr.mxu0 0.0
    %2318 = vmatpush1.msra.mxu0 0.0
    %2319 = vmatprep.subr.mxu0 0.0
    %2320 = vmatpush1.msra.mxu0 0.0
    %2321 = vmatprep.subr.mxu0 0.0
    %2322 = vmatpush1.msra.mxu0 0.0
    %2323 = vmatprep.subr.mxu0 0.0
    %2324 = vmatpush1.msra.mxu0 0.0
    %2325 = vmatprep.subr.mxu0 0.0
    %2326 = vmatpush1.msra.mxu0 0.0
    %2327 = vmatprep.subr.mxu0 0.0
    %2328 = vmatpush1.msra.mxu0 0.0
    %2329 = vmatprep.subr.mxu0 0.0
    %2330 = vmatpush1.msra.mxu0 0.0
    %2331 = vmatprep.subr.mxu0 0.0
    %2332 = vmatpush1.msra.mxu0 0.0
    %2333 = vmatprep.subr.mxu0 0.0
    %2334 = vmatpush1.msra.mxu0 0.0
    %2335 = vmatprep.subr.mxu0 0.0
    %2336 = vmatpush1.msra.mxu0 0.0
    %2337 = vmatprep.subr.mxu0 0.0
    %2338 = vmatpush1.msra.mxu0 0.0
    %2339 = vmatprep.subr.mxu0 0.0
    %2340 = vmatpush1.msra.mxu0 0.0
    %2341 = vmatprep.subr.mxu0 0.0
    %2342 = vmatpush1.msra.mxu0 0.0
    %2343 = vmatprep.subr.mxu0 0.0
    %2344 = vmatpush1.msra.mxu0 0.0
    %2345 = vmatprep.subr.mxu0 0.0
    %2346 = vmatpush1.msra.mxu0 0.0
    %2347 = vmatprep.subr.mxu0 0.0
    %2348 = vmatpush1.msra.mxu0 0.0
    %2349 = vmatprep.subr.mxu0 0.0
    %2350 = vmatpush1.msra.mxu0 0.0
    %2351 = vmatprep.subr.mxu0 0.0
    %2352 = vmatpush1.msra.mxu0 0.0
    %2353 = vmatprep.subr.mxu0 0.0
    %2354 = vmatpush1.msra.mxu0 0.0
    %2355 = vmatprep.subr.mxu0 0.0
    %2356 = vmatpush1.msra.mxu0 0.0
    %2357 = vmatprep.subr.mxu0 0.0
    %2358 = vmatpush1.msra.mxu0 0.0
    %2359 = vmatprep.subr.mxu0 0.0
    %2360 = vmatpush1.msra.mxu0 0.0
    %2361 = vmatprep.mubr.f32.mxu0 0.0
    %2362 = vmatmul.mubr.f32.gmra.mrb[0].mxu0 %v2295
    %v2363 = vpop.f32.mrb[0].mxu0
    %v2364 = vadd.f32 0.0, %v2363
    %v2365 = vpop.f32.mrb[0].mxu0
    %2366 = vdwg.mxu0
    %v2368 = vsel %vm1305, %v1997, 0
    %2370 = vmatprep.subr.mxu0 0.0
    %2371 = vmatpush1.msra.mxu0 %v1302
    %2372 = vmatprep.subr.mxu0 0.0
    %2373 = vmatpush1.msra.mxu0 0.0
    %2374 = vmatprep.subr.mxu0 0.0
    %2375 = vmatpush1.msra.mxu0 0.0
    %2376 = vmatprep.subr.mxu0 0.0
    %2377 = vmatpush1.msra.mxu0 0.0
    %2378 = vmatprep.subr.mxu0 0.0
    %2379 = vmatpush1.msra.mxu0 0.0
    %2380 = vmatprep.subr.mxu0 0.0
    %2381 = vmatpush1.msra.mxu0 0.0
    %2382 = vmatprep.subr.mxu0 0.0
    %2383 = vmatpush1.msra.mxu0 0.0
    %2384 = vmatprep.subr.mxu0 0.0
    %2385 = vmatpush1.msra.mxu0 0.0
    %2386 = vmatprep.subr.mxu0 0.0
    %2387 = vmatpush1.msra.mxu0 0.0
    %2388 = vmatprep.subr.mxu0 0.0
    %2389 = vmatpush1.msra.mxu0 0.0
    %2390 = vmatprep.subr.mxu0 0.0
    %2391 = vmatpush1.msra.mxu0 0.0
    %2392 = vmatprep.subr.mxu0 0.0
    %2393 = vmatpush1.msra.mxu0 0.0
    %2394 = vmatprep.subr.mxu0 0.0
    %2395 = vmatpush1.msra.mxu0 0.0
    %2396 = vmatprep.subr.mxu0 0.0
    %2397 = vmatpush1.msra.mxu0 0.0
    %2398 = vmatprep.subr.mxu0 0.0
    %2399 = vmatpush1.msra.mxu0 0.0
    %2400 = vmatprep.subr.mxu0 0.0
    %2401 = vmatpush1.msra.mxu0 0.0
    %2402 = vmatprep.subr.mxu0 0.0
    %2403 = vmatpush1.msra.mxu0 0.0
    %2404 = vmatprep.subr.mxu0 0.0
    %2405 = vmatpush1.msra.mxu0 0.0
    %2406 = vmatprep.subr.mxu0 0.0
    %2407 = vmatpush1.msra.mxu0 0.0
    %2408 = vmatprep.subr.mxu0 0.0
    %2409 = vmatpush1.msra.mxu0 0.0
    %2410 = vmatprep.subr.mxu0 0.0
    %2411 = vmatpush1.msra.mxu0 0.0
    %2412 = vmatprep.subr.mxu0 0.0
    %2413 = vmatpush1.msra.mxu0 0.0
    %2414 = vmatprep.subr.mxu0 0.0
    %2415 = vmatpush1.msra.mxu0 0.0
    %2416 = vmatprep.subr.mxu0 0.0
    %2417 = vmatpush1.msra.mxu0 0.0
    %2418 = vmatprep.subr.mxu0 0.0
    %2419 = vmatpush1.msra.mxu0 0.0
    %2420 = vmatprep.subr.mxu0 0.0
    %2421 = vmatpush1.msra.mxu0 0.0
    %2422 = vmatprep.subr.mxu0 0.0
    %2423 = vmatpush1.msra.mxu0 0.0
    %2424 = vmatprep.subr.mxu0 0.0
    %2425 = vmatpush1.msra.mxu0 0.0
    %2426 = vmatprep.subr.mxu0 0.0
    %2427 = vmatpush1.msra.mxu0 0.0
    %2428 = vmatprep.subr.mxu0 0.0
    %2429 = vmatpush1.msra.mxu0 0.0
    %2430 = vmatprep.subr.mxu0 0.0
    %2431 = vmatpush1.msra.mxu0 0.0
    %2432 = vmatprep.subr.mxu0 0.0
    %2433 = vmatpush1.msra.mxu0 0.0
    %2434 = vmatprep.mubr.f32.mxu0 0.0
    %2435 = vmatmul.mubr.f32.gmra.mrb[0].mxu0 %v2368
    %v2436 = vpop.f32.mrb[0].mxu0
    %v2437 = vadd.f32 0.0, %v2436
    %v2438 = vpop.f32.mrb[0].mxu0
    %2439 = vdwg.mxu0
    %v2441 = vsel %vm1305, %v1999, 0
    %2443 = vmatprep.subr.mxu0 0.0
    %2444 = vmatpush1.msra.mxu0 %v1303
    %2445 = vmatprep.subr.mxu0 0.0
    %2446 = vmatpush1.msra.mxu0 0.0
    %2447 = vmatprep.subr.mxu0 0.0
    %2448 = vmatpush1.msra.mxu0 0.0
    %2449 = vmatprep.subr.mxu0 0.0
    %2450 = vmatpush1.msra.mxu0 0.0
    %2451 = vmatprep.subr.mxu0 0.0
    %2452 = vmatpush1.msra.mxu0 0.0
    %2453 = vmatprep.subr.mxu0 0.0
    %2454 = vmatpush1.msra.mxu0 0.0
    %2455 = vmatprep.subr.mxu0 0.0
    %2456 = vmatpush1.msra.mxu0 0.0
    %2457 = vmatprep.subr.mxu0 0.0
    %2458 = vmatpush1.msra.mxu0 0.0
    %2459 = vmatprep.subr.mxu0 0.0
    %2460 = vmatpush1.msra.mxu0 0.0
    %2461 = vmatprep.subr.mxu0 0.0
    %2462 = vmatpush1.msra.mxu0 0.0
    %2463 = vmatprep.subr.mxu0 0.0
    %2464 = vmatpush1.msra.mxu0 0.0
    %2465 = vmatprep.subr.mxu0 0.0
    %2466 = vmatpush1.msra.mxu0 0.0
    %2467 = vmatprep.subr.mxu0 0.0
    %2468 = vmatpush1.msra.mxu0 0.0
    %2469 = vmatprep.subr.mxu0 0.0
    %2470 = vmatpush1.msra.mxu0 0.0
    %2471 = vmatprep.subr.mxu0 0.0
    %2472 = vmatpush1.msra.mxu0 0.0
    %2473 = vmatprep.subr.mxu0 0.0
    %2474 = vmatpush1.msra.mxu0 0.0
    %2475 = vmatprep.subr.mxu0 0.0
    %2476 = vmatpush1.msra.mxu0 0.0
    %2477 = vmatprep.subr.mxu0 0.0
    %2478 = vmatpush1.msra.mxu0 0.0
    %2479 = vmatprep.subr.mxu0 0.0
    %2480 = vmatpush1.msra.mxu0 0.0
    %2481 = vmatprep.subr.mxu0 0.0
    %2482 = vmatpush1.msra.mxu0 0.0
    %2483 = vmatprep.subr.mxu0 0.0
    %2484 = vmatpush1.msra.mxu0 0.0
    %2485 = vmatprep.subr.mxu0 0.0
    %2486 = vmatpush1.msra.mxu0 0.0
    %2487 = vmatprep.subr.mxu0 0.0
    %2488 = vmatpush1.msra.mxu0 0.0
    %2489 = vmatprep.subr.mxu0 0.0
    %2490 = vmatpush1.msra.mxu0 0.0
    %2491 = vmatprep.subr.mxu0 0.0
    %2492 = vmatpush1.msra.mxu0 0.0
    %2493 = vmatprep.subr.mxu0 0.0
    %2494 = vmatpush1.msra.mxu0 0.0
    %2495 = vmatprep.subr.mxu0 0.0
    %2496 = vmatpush1.msra.mxu0 0.0
    %2497 = vmatprep.subr.mxu0 0.0
    %2498 = vmatpush1.msra.mxu0 0.0
    %2499 = vmatprep.subr.mxu0 0.0
    %2500 = vmatpush1.msra.mxu0 0.0
    %2501 = vmatprep.subr.mxu0 0.0
    %2502 = vmatpush1.msra.mxu0 0.0
    %2503 = vmatprep.subr.mxu0 0.0
    %2504 = vmatpush1.msra.mxu0 0.0
    %2505 = vmatprep.subr.mxu0 0.0
    %2506 = vmatpush1.msra.mxu0 0.0
    %2507 = vmatprep.mubr.f32.mxu0 0.0
    %2508 = vmatmul.mubr.f32.gmra.mrb[0].mxu0 %v2441
    %v2509 = vpop.f32.mrb[0].mxu0
    %v2510 = vadd.f32 0.0, %v2509
    %v2511 = vpop.f32.mrb[0].mxu0
    %2512 = vdwg.mxu0
    %v2514 = vsel %vm1305, %v2001, 0
    %2516 = vmatprep.subr.mxu0 0.0
    %2517 = vmatpush1.msra.mxu0 %v1304
    %2518 = vmatprep.subr.mxu0 0.0
    %2519 = vmatpush1.msra.mxu0 0.0
    %2520 = vmatprep.subr.mxu0 0.0
    %2521 = vmatpush1.msra.mxu0 0.0
    %2522 = vmatprep.subr.mxu0 0.0
    %2523 = vmatpush1.msra.mxu0 0.0
    %2524 = vmatprep.subr.mxu0 0.0
    %2525 = vmatpush1.msra.mxu0 0.0
    %2526 = vmatprep.subr.mxu0 0.0
    %2527 = vmatpush1.msra.mxu0 0.0
    %2528 = vmatprep.subr.mxu0 0.0
    %2529 = vmatpush1.msra.mxu0 0.0
    %2530 = vmatprep.subr.mxu0 0.0
    %2531 = vmatpush1.msra.mxu0 0.0
    %2532 = vmatprep.subr.mxu0 0.0
    %2533 = vmatpush1.msra.mxu0 0.0
    %2534 = vmatprep.subr.mxu0 0.0
    %2535 = vmatpush1.msra.mxu0 0.0
    %2536 = vmatprep.subr.mxu0 0.0
    %2537 = vmatpush1.msra.mxu0 0.0
    %2538 = vmatprep.subr.mxu0 0.0
    %2539 = vmatpush1.msra.mxu0 0.0
    %2540 = vmatprep.subr.mxu0 0.0
    %2541 = vmatpush1.msra.mxu0 0.0
    %2542 = vmatprep.subr.mxu0 0.0
    %2543 = vmatpush1.msra.mxu0 0.0
    %2544 = vmatprep.subr.mxu0 0.0
    %2545 = vmatpush1.msra.mxu0 0.0
    %2546 = vmatprep.subr.mxu0 0.0
    %2547 = vmatpush1.msra.mxu0 0.0
    %2548 = vmatprep.subr.mxu0 0.0
    %2549 = vmatpush1.msra.mxu0 0.0
    %2550 = vmatprep.subr.mxu0 0.0
    %2551 = vmatpush1.msra.mxu0 0.0
    %2552 = vmatprep.subr.mxu0 0.0
    %2553 = vmatpush1.msra.mxu0 0.0
    %2554 = vmatprep.subr.mxu0 0.0
    %2555 = vmatpush1.msra.mxu0 0.0
    %2556 = vmatprep.subr.mxu0 0.0
    %2557 = vmatpush1.msra.mxu0 0.0
    %2558 = vmatprep.subr.mxu0 0.0
    %2559 = vmatpush1.msra.mxu0 0.0
    %2560 = vmatprep.subr.mxu0 0.0
    %2561 = vmatpush1.msra.mxu0 0.0
    %2562 = vmatprep.subr.mxu0 0.0
    %2563 = vmatpush1.msra.mxu0 0.0
    %2564 = vmatprep.subr.mxu0 0.0
    %2565 = vmatpush1.msra.mxu0 0.0
    %2566 = vmatprep.subr.mxu0 0.0
    %2567 = vmatpush1.msra.mxu0 0.0
    %2568 = vmatprep.subr.mxu0 0.0
    %2569 = vmatpush1.msra.mxu0 0.0
    %2570 = vmatprep.subr.mxu0 0.0
    %2571 = vmatpush1.msra.mxu0 0.0
    %2572 = vmatprep.subr.mxu0 0.0
    %2573 = vmatpush1.msra.mxu0 0.0
    %2574 = vmatprep.subr.mxu0 0.0
    %2575 = vmatpush1.msra.mxu0 0.0
    %2576 = vmatprep.subr.mxu0 0.0
    %2577 = vmatpush1.msra.mxu0 0.0
    %2578 = vmatprep.subr.mxu0 0.0
    %2579 = vmatpush1.msra.mxu0 0.0
    %2580 = vmatprep.mubr.f32.mxu0 0.0
    %2581 = vmatmul.mubr.f32.gmra.mrb[0].mxu0 %v2514
    %v2582 = vpop.f32.mrb[0].mxu0
    %v2583 = vadd.f32 0.0, %v2582
    %v2584 = vpop.f32.mrb[0].mxu0
    %2585 = vdwg.mxu0
    %v2586 = vcombine.low %v2072, %v2218
    %v2587 = vcombine.high %v2072, %v2218
    %v2589 = vunpack.c.l.s4 1983009808
    %v2590 = vunpack.c.0.s8 %v2589
    %v2591 = vlaneseq
    %v2592 = vshrl.u32 %v2591, 7
    %v2593 = vsub.s32 %v2590, %v2592
    %v2594 = vrot.slane %v2586, %v2593
    %v2596 = vunpack.c.l.s4 1983009808
    %v2597 = vunpack.c.0.s8 %v2596
    %v2598 = vlaneseq
    %v2599 = vshrl.u32 %v2598, 7
    %v2600 = vsub.s32 %v2597, %v2599
    %v2601 = vrot.slane %v2587, %v2600
    %v2602 = vcombine.low %v2145, %v2291
    %v2603 = vcombine.high %v2145, %v2291
    %v2605 = vunpack.c.l.s4 1983009808
    %v2606 = vunpack.c.0.s8 %v2605
    %v2607 = vlaneseq
    %v2608 = vshrl.u32 %v2607, 7
    %v2609 = vsub.s32 %v2606, %v2608
    %v2610 = vrot.slane %v2602, %v2609
    %v2612 = vunpack.c.l.s4 1983009808
    %v2613 = vunpack.c.0.s8 %v2612
    %v2614 = vlaneseq
    %v2615 = vshrl.u32 %v2614, 7
    %v2616 = vsub.s32 %v2613, %v2615
    %v2617 = vrot.slane %v2603, %v2616
    %v2618 = vcombine.low %v2594, %v2610
    %v2619 = vcombine.high %v2594, %v2610
    %v2621 = vunpack.c.l.s4 1934713408
    %v2622 = vunpack.c.0.s8 %v2621
    %v2623 = vlaneseq
    %v2624 = vshrl.u32 %v2623, 7
    %v2625 = vsub.s32 %v2622, %v2624
    %v2626 = vrot.slane %v2618, %v2625
    %v2628 = vunpack.c.l.s4 1934713408
    %v2629 = vunpack.c.0.s8 %v2628
    %v2630 = vlaneseq
    %v2631 = vshrl.u32 %v2630, 7
    %v2632 = vsub.s32 %v2629, %v2631
    %v2633 = vrot.slane %v2619, %v2632
    %v2634 = vcombine.low %v2601, %v2617
    %v2635 = vcombine.high %v2601, %v2617
    %v2637 = vunpack.c.l.s4 1934713408
    %v2638 = vunpack.c.0.s8 %v2637
    %v2639 = vlaneseq
    %v2640 = vshrl.u32 %v2639, 7
    %v2641 = vsub.s32 %v2638, %v2640
    %v2642 = vrot.slane %v2634, %v2641
    %v2644 = vunpack.c.l.s4 1934713408
    %v2645 = vunpack.c.0.s8 %v2644
    %v2646 = vlaneseq
    %v2647 = vshrl.u32 %v2646, 7
    %v2648 = vsub.s32 %v2645, %v2647
    %v2649 = vrot.slane %v2635, %v2648
    %v2650 = vcombine.high %v2626, 0.0
    %v2651 = vcombine.high %v2633, 0.0
    %v2652 = vcombine.high %v2642, 0.0
    %v2653 = vcombine.high %v2649, 0.0
    %v2654 = vcombine.low %v2364, %v2510
    %v2655 = vcombine.high %v2364, %v2510
    %v2657 = vunpack.c.l.s4 1983009808
    %v2658 = vunpack.c.0.s8 %v2657
    %v2659 = vlaneseq
    %v2660 = vshrl.u32 %v2659, 7
    %v2661 = vsub.s32 %v2658, %v2660
    %v2662 = vrot.slane %v2654, %v2661
    %v2664 = vunpack.c.l.s4 1983009808
    %v2665 = vunpack.c.0.s8 %v2664
    %v2666 = vlaneseq
    %v2667 = vshrl.u32 %v2666, 7
    %v2668 = vsub.s32 %v2665, %v2667
    %v2669 = vrot.slane %v2655, %v2668
    %v2670 = vcombine.low %v2437, %v2583
    %v2671 = vcombine.high %v2437, %v2583
    %v2673 = vunpack.c.l.s4 1983009808
    %v2674 = vunpack.c.0.s8 %v2673
    %v2675 = vlaneseq
    %v2676 = vshrl.u32 %v2675, 7
    %v2677 = vsub.s32 %v2674, %v2676
    %v2678 = vrot.slane %v2670, %v2677
    %v2680 = vunpack.c.l.s4 1983009808
    %v2681 = vunpack.c.0.s8 %v2680
    %v2682 = vlaneseq
    %v2683 = vshrl.u32 %v2682, 7
    %v2684 = vsub.s32 %v2681, %v2683
    %v2685 = vrot.slane %v2671, %v2684
    %v2686 = vcombine.low %v2662, %v2678
    %v2687 = vcombine.high %v2662, %v2678
    %v2689 = vunpack.c.l.s4 1934713408
    %v2690 = vunpack.c.0.s8 %v2689
    %v2691 = vlaneseq
    %v2692 = vshrl.u32 %v2691, 7
    %v2693 = vsub.s32 %v2690, %v2692
    %v2694 = vrot.slane %v2686, %v2693
    %v2696 = vunpack.c.l.s4 1934713408
    %v2697 = vunpack.c.0.s8 %v2696
    %v2698 = vlaneseq
    %v2699 = vshrl.u32 %v2698, 7
    %v2700 = vsub.s32 %v2697, %v2699
    %v2701 = vrot.slane %v2687, %v2700
    %v2702 = vcombine.low %v2669, %v2685
    %v2703 = vcombine.high %v2669, %v2685
    %v2705 = vunpack.c.l.s4 1934713408
    %v2706 = vunpack.c.0.s8 %v2705
    %v2707 = vlaneseq
    %v2708 = vshrl.u32 %v2707, 7
    %v2709 = vsub.s32 %v2706, %v2708
    %v2710 = vrot.slane %v2702, %v2709
    %v2712 = vunpack.c.l.s4 1934713408
    %v2713 = vunpack.c.0.s8 %v2712
    %v2714 = vlaneseq
    %v2715 = vshrl.u32 %v2714, 7
    %v2716 = vsub.s32 %v2713, %v2715
    %v2717 = vrot.slane %v2703, %v2716
    %v2718 = vcombine.high %v2694, 0.0
    %v2719 = vcombine.high %v2701, 0.0
    %v2720 = vcombine.high %v2710, 0.0
    %v2721 = vcombine.high %v2717, 0.0
    %v2722 = vcombine.low %v2626, %v2633
    %v2724 = vunpack.c.l.s4 1983009808
    %v2725 = vunpack.c.0.s8 %v2724
    %v2726 = vlaneseq
    %v2727 = vshrl.u32 %v2726, 7
    %v2728 = vsub.s32 %v2725, %v2727
    %v2729 = vrot.slane %v2722, %v2728
    %v2730 = vcombine.low %v2650, %v2651
    %v2732 = vunpack.c.l.s4 1983009808
    %v2733 = vunpack.c.0.s8 %v2732
    %v2734 = vlaneseq
    %v2735 = vshrl.u32 %v2734, 7
    %v2736 = vsub.s32 %v2733, %v2735
    %v2737 = vrot.slane %v2730, %v2736
    %v2738 = vcombine.low %v2642, %v2649
    %v2740 = vunpack.c.l.s4 1983009808
    %v2741 = vunpack.c.0.s8 %v2740
    %v2742 = vlaneseq
    %v2743 = vshrl.u32 %v2742, 7
    %v2744 = vsub.s32 %v2741, %v2743
    %v2745 = vrot.slane %v2738, %v2744
    %v2746 = vcombine.low %v2652, %v2653
    %v2748 = vunpack.c.l.s4 1983009808
    %v2749 = vunpack.c.0.s8 %v2748
    %v2750 = vlaneseq
    %v2751 = vshrl.u32 %v2750, 7
    %v2752 = vsub.s32 %v2749, %v2751
    %v2753 = vrot.slane %v2746, %v2752
    %v2754 = vcombine.low %v2729, %v2737
    %v2755 = vcombine.high %v2729, %v2737
    %v2757 = vunpack.c.l.s4 1934713408
    %v2758 = vunpack.c.0.s8 %v2757
    %v2759 = vlaneseq
    %v2760 = vshrl.u32 %v2759, 7
    %v2761 = vsub.s32 %v2758, %v2760
    %v2762 = vrot.slane %v2754, %v2761
    %v2764 = vunpack.c.l.s4 1934713408
    %v2765 = vunpack.c.0.s8 %v2764
    %v2766 = vlaneseq
    %v2767 = vshrl.u32 %v2766, 7
    %v2768 = vsub.s32 %v2765, %v2767
    %v2769 = vrot.slane %v2755, %v2768
    %v2770 = vcombine.low %v2745, %v2753
    %v2771 = vcombine.high %v2745, %v2753
    %v2773 = vunpack.c.l.s4 1934713408
    %v2774 = vunpack.c.0.s8 %v2773
    %v2775 = vlaneseq
    %v2776 = vshrl.u32 %v2775, 7
    %v2777 = vsub.s32 %v2774, %v2776
    %v2778 = vrot.slane %v2770, %v2777
    %v2780 = vunpack.c.l.s4 1934713408
    %v2781 = vunpack.c.0.s8 %v2780
    %v2782 = vlaneseq
    %v2783 = vshrl.u32 %v2782, 7
    %v2784 = vsub.s32 %v2781, %v2783
    %v2785 = vrot.slane %v2771, %v2784
    %v2786 = vcombine.low %v2762, %v2778
    %v2787 = vcombine.high %v2762, %v2778
    %v2788 = vcombine.low %v2769, %v2785
    %v2789 = vcombine.high %v2769, %v2785
    %v2790 = vcombine.low %v2694, %v2701
    %v2792 = vunpack.c.l.s4 1983009808
    %v2793 = vunpack.c.0.s8 %v2792
    %v2794 = vlaneseq
    %v2795 = vshrl.u32 %v2794, 7
    %v2796 = vsub.s32 %v2793, %v2795
    %v2797 = vrot.slane %v2790, %v2796
    %v2798 = vcombine.low %v2718, %v2719
    %v2800 = vunpack.c.l.s4 1983009808
    %v2801 = vunpack.c.0.s8 %v2800
    %v2802 = vlaneseq
    %v2803 = vshrl.u32 %v2802, 7
    %v2804 = vsub.s32 %v2801, %v2803
    %v2805 = vrot.slane %v2798, %v2804
    %v2806 = vcombine.low %v2710, %v2717
    %v2808 = vunpack.c.l.s4 1983009808
    %v2809 = vunpack.c.0.s8 %v2808
    %v2810 = vlaneseq
    %v2811 = vshrl.u32 %v2810, 7
    %v2812 = vsub.s32 %v2809, %v2811
    %v2813 = vrot.slane %v2806, %v2812
    %v2814 = vcombine.low %v2720, %v2721
    %v2816 = vunpack.c.l.s4 1983009808
    %v2817 = vunpack.c.0.s8 %v2816
    %v2818 = vlaneseq
    %v2819 = vshrl.u32 %v2818, 7
    %v2820 = vsub.s32 %v2817, %v2819
    %v2821 = vrot.slane %v2814, %v2820
    %v2822 = vcombine.low %v2797, %v2805
    %v2823 = vcombine.high %v2797, %v2805
    %v2825 = vunpack.c.l.s4 1934713408
    %v2826 = vunpack.c.0.s8 %v2825
    %v2827 = vlaneseq
    %v2828 = vshrl.u32 %v2827, 7
    %v2829 = vsub.s32 %v2826, %v2828
    %v2830 = vrot.slane %v2822, %v2829
    %v2832 = vunpack.c.l.s4 1934713408
    %v2833 = vunpack.c.0.s8 %v2832
    %v2834 = vlaneseq
    %v2835 = vshrl.u32 %v2834, 7
    %v2836 = vsub.s32 %v2833, %v2835
    %v2837 = vrot.slane %v2823, %v2836
    %v2838 = vcombine.low %v2813, %v2821
    %v2839 = vcombine.high %v2813, %v2821
    %v2841 = vunpack.c.l.s4 1934713408
    %v2842 = vunpack.c.0.s8 %v2841
    %v2843 = vlaneseq
    %v2844 = vshrl.u32 %v2843, 7
    %v2845 = vsub.s32 %v2842, %v2844
    %v2846 = vrot.slane %v2838, %v2845
    %v2848 = vunpack.c.l.s4 1934713408
    %v2849 = vunpack.c.0.s8 %v2848
    %v2850 = vlaneseq
    %v2851 = vshrl.u32 %v2850, 7
    %v2852 = vsub.s32 %v2849, %v2851
    %v2853 = vrot.slane %v2839, %v2852
    %v2854 = vcombine.low %v2830, %v2846
    %v2855 = vcombine.high %v2830, %v2846
    %v2856 = vcombine.low %v2837, %v2853
    %v2857 = vcombine.high %v2837, %v2853
    %2860 = vrot.lane.b32.xlu0 %v2787, 8
    %v2861 = vpop.permute.xlu0 %2860
    %2862 = vrot.lane.b32.xlu0 %v2855, 8
    %v2863 = vpop.permute.xlu0 %2862
    %2868 = vrot.lane.b32.xlu0 %v2788, 16
    %v2869 = vpop.permute.xlu0 %2868
    %2870 = vrot.lane.b32.xlu0 %v2856, 16
    %v2871 = vpop.permute.xlu0 %2870
    %2876 = vrot.lane.b32.xlu0 %v2789, 24
    %v2877 = vpop.permute.xlu0 %2876
    %2878 = vrot.lane.b32.xlu0 %v2857, 24
    %v2879 = vpop.permute.xlu0 %2878
    %v2882 = vsel %vm1305, %v2786, %v2861
    %v2883 = vsel %vm1305, %v2854, %v2863
    %vm2884 = vcmask 130048
    %v2885 = vsel %vm2884, %v2882, %v2869
    %v2886 = vsel %vm2884, %v2883, %v2871
    %vm2887 = vcmask 195584
    %v2888 = vsel %vm2887, %v2885, %v2877
    %v2889 = vsel %vm2887, %v2886, %v2879
    %v2890 = vld [vmem:[#allocation10] sm:$0xff]
    %v2891 = vld [vmem:[#allocation10 + $0x8] sm:$0xff]
    %v2892 = vld [vmem:[#allocation10 + $0x10] sm:$0xff]
    %v2893 = vld [vmem:[#allocation10 + $0x18] sm:$0xff]
    %v2894 = vlaneseq
    %v2895 = vshrl.u32 %v2894, 7
    %v2896 = vsub.s32 6, %v2895
    %v2897 = vrot.slane %v95, %v2896
    %v2899 = vsel %vm102, %v2888, 0
    %v2902 = vsel %vm102, %v2889, 0
    %2904 = vmatprep.subr.mxu0 0.0
    %2905 = vmatpush1.msra.mxu0 %v2890
    %2906 = vmatprep.subr.mxu0 0.0
    %2907 = vmatpush1.msra.mxu0 %v2891
    %2908 = vmatprep.subr.mxu0 0.0
    %2909 = vmatpush1.msra.mxu0 %v2892
    %2910 = vmatprep.subr.mxu0 0.0
    %2911 = vmatpush1.msra.mxu0 %v2893
    %2912 = vmatprep.subr.mxu0 0.0
    %2913 = vmatpush1.msra.mxu0 0.0
    %2914 = vmatprep.subr.mxu0 0.0
    %2915 = vmatpush1.msra.mxu0 0.0
    %2916 = vmatprep.subr.mxu0 0.0
    %2917 = vmatpush1.msra.mxu0 0.0
    %2918 = vmatprep.subr.mxu0 0.0
    %2919 = vmatpush1.msra.mxu0 0.0
    %2920 = vmatprep.subr.mxu0 0.0
    %2921 = vmatpush1.msra.mxu0 0.0
    %2922 = vmatprep.subr.mxu0 0.0
    %2923 = vmatpush1.msra.mxu0 0.0
    %2924 = vmatprep.subr.mxu0 0.0
    %2925 = vmatpush1.msra.mxu0 0.0
    %2926 = vmatprep.subr.mxu0 0.0
    %2927 = vmatpush1.msra.mxu0 0.0
    %2928 = vmatprep.subr.mxu0 0.0
    %2929 = vmatpush1.msra.mxu0 0.0
    %2930 = vmatprep.subr.mxu0 0.0
    %2931 = vmatpush1.msra.mxu0 0.0
    %2932 = vmatprep.subr.mxu0 0.0
    %2933 = vmatpush1.msra.mxu0 0.0
    %2934 = vmatprep.subr.mxu0 0.0
    %2935 = vmatpush1.msra.mxu0 0.0
    %2936 = vmatprep.subr.mxu0 0.0
    %2937 = vmatpush1.msra.mxu0 0.0
    %2938 = vmatprep.subr.mxu0 0.0
    %2939 = vmatpush1.msra.mxu0 0.0
    %2940 = vmatprep.subr.mxu0 0.0
    %2941 = vmatpush1.msra.mxu0 0.0
    %2942 = vmatprep.subr.mxu0 0.0
    %2943 = vmatpush1.msra.mxu0 0.0
    %2944 = vmatprep.subr.mxu0 0.0
    %2945 = vmatpush1.msra.mxu0 0.0
    %2946 = vmatprep.subr.mxu0 0.0
    %2947 = vmatpush1.msra.mxu0 0.0
    %2948 = vmatprep.subr.mxu0 0.0
    %2949 = vmatpush1.msra.mxu0 0.0
    %2950 = vmatprep.subr.mxu0 0.0
    %2951 = vmatpush1.msra.mxu0 0.0
    %2952 = vmatprep.subr.mxu0 0.0
    %2953 = vmatpush1.msra.mxu0 0.0
    %2954 = vmatprep.subr.mxu0 0.0
    %2955 = vmatpush1.msra.mxu0 0.0
    %2956 = vmatprep.subr.mxu0 0.0
    %2957 = vmatpush1.msra.mxu0 0.0
    %2958 = vmatprep.subr.mxu0 0.0
    %2959 = vmatpush1.msra.mxu0 0.0
    %2960 = vmatprep.subr.mxu0 0.0
    %2961 = vmatpush1.msra.mxu0 0.0
    %2962 = vmatprep.subr.mxu0 0.0
    %2963 = vmatpush1.msra.mxu0 0.0
    %2964 = vmatprep.subr.mxu0 0.0
    %2965 = vmatpush1.msra.mxu0 0.0
    %2966 = vmatprep.subr.mxu0 0.0
    %2967 = vmatpush1.msra.mxu0 0.0
    %2968 = vmatprep.mubr.f32.mxu0 0.0
    %2969 = vmatmul.mubr.f32.gmra.mrb[0].mxu0 %v2899
    %v2970 = vpop.f32.mrb[0].mxu0
    %v2971 = vadd.f32 %v2897, %v2970
    %v2972 = vpop.f32.mrb[0].mxu0
    %2973 = vmatprep.mubr.f32.mxu0 0.0
    %2974 = vmatmul.mubr.f32.gmra.mrb[0].mxu0 %v2902
    %v2975 = vpop.f32.mrb[0].mxu0
    %v2976 = vadd.f32 %v2897, %v2975
    %v2977 = vpop.f32.mrb[0].mxu0
    %2978 = vdwg.mxu0
    %v2979 = vadd.f32 %v2971, %v216
    %v2980 = vadd.f32 %v2976, %v217
    %2981 = vst.msk [vmem:[#allocation11] sm:$0xff] %vm102, %v2979
    %2982 = vst.msk [vmem:[#allocation11 + $0x8] sm:$0xff] %vm102, %v2980
    // Predicated region
    $region50: #{ahl_layer.1} parent=1 // pred_check
      _
    $region51: #{ahl_layer.1} parent=1 // pred_check_branch
      %2984 = sbr.rel (0) target = $region53
    $region52: #{ahl_layer.1} parent=1 // pred_region
      %s2986 = ssub.s32 256, 256
      %2987 = vsyncadd [#allocation4], %s2986
      %s2988 = sshll.u32 [#allocation11], 4
      %s2989 = int_to_ptr.vmem [resolvable:$true] %s2988
      %2994 = dma.vmem_to_hbm [thread:$0]  %s2989, 256, %s7, [#allocation4], 128, 128, 8
    $region53: #{ahl_layer.1} parent=1 // pred_fallthru
      _
    // Predicated region
    $region54: #{ahl_layer.1} parent=1 // pred_check
      _
    $region55: #{ahl_layer.1} parent=1 // pred_check_branch
      %2996 = sbr.rel (0) target = $region57
    $region56: #{ahl_layer.1} parent=1 // pred_region
      %2997 = dma.done [#allocation4], 256
    $region57: #{ahl_layer.1} parent=1 // pred_fallthru
      _
    %2998 = vsyncpa [#allocation3], 1
    %2999 = vsyncpa [#allocation6], 1
    %3000 = vsyncpa [#allocation9], 1
    %3001 = vsyncpa [#allocation4], 1

</llo_original>
